<compile_context>
chip_gen: v7x
topology: tpu7x:2x2x1
jax: 0.10.0
libtpu: 0.0.40
codegen_flags: <defaults>
</compile_context>

<pallas_src>
import jax
import jax.numpy as jnp
from jax.experimental import pallas as pl
from jax.experimental.pallas import tpu as pltpu

EPS = 1e-5
NEG_SLOPE = 0.2
LANE = 128
NARROW = 128            # 64/8/32/2-wide layers are padded to one 128-lane tile

# Row indices inside the packed (16, Vw) f32 parameter-vector table.
(B_G0, B_G1, BN1G, BN1B, B_GC1, BN2G, BN2B,
 B_G2A, B_G2B, F1B, F2B, F3B, BN3G, BN3B) = range(14)
N_VEC_ROWS = 16


def _lrelu(x):
    return jnp.where(x >= 0, x, NEG_SLOPE * x)


def _round_up(n, m):
    return (n + m - 1) // m * m


# ----------------------------------------------------------------------------
# Kernel
# ----------------------------------------------------------------------------
def gnn_kernel(s_ref, nf_ref, wsq_ref, wg0_ref, wn_ref, f1w_ref, vecs_ref,
               out_ref):
    f32 = jnp.float32
    R, Cn = nf_ref.shape              # R = bz*roi rows, Cn = padded node_in
    Cr = wg0_ref.shape[1]             # padded roi width
    bz = out_ref.shape[0]
    roi = R // bz

    # Static row offsets inside the packed 128-lane-output weight buffer.
    O_G2A, O_G2B, O_F2, O_F3 = 0, Cr, Cr + NARROW, Cr + NARROW + 256

    V = vecs_ref[...]                 # (16, Vw) f32: biases / BN vectors

    def row(i, w):                    # (1, w) static slice of one parameter row
        return V[i:i + 1, :w]

    def mm(x, w):                     # bf16 MXU matmul, f32 accumulation
        return jnp.dot(x.astype(w.dtype), w, preferred_element_type=f32)

    # einsum('ijk,ijp->ijp', m, x) == x * m.sum(-1): only the row-sum is used.
    s = s_ref[...]                                   # (R, 1) f32
    s_b = jnp.broadcast_to(s, (R, Cr))               # hoisted, reused twice
    ones_r = jnp.ones((1, R), f32)                   # hoisted, shared by bn1/bn2

    def bn_cols(x, gi, bi):
        # BatchNorm1d over (R, C), training mode. One fused f32 stat matmul
        # (fills the 256-wide MXU); inputs stay f32 so the single-pass variance
        # does not suffer bf16 cancellation.
        C = x.shape[1]
        s12 = jnp.dot(ones_r, jnp.concatenate([x, x * x], axis=1),
                      preferred_element_type=f32)    # (1, 2C)
        mu = s12[:, :C] / R
        var = jnp.maximum(s12[:, C:] / R - mu * mu, 0.0)
        scale = jax.lax.rsqrt(var + EPS) * row(gi, C)
        shift = row(bi, C) - mu * scale
        return x * scale + shift                     # fused normalize + affine

    # ---- trunk (activations f32, matmul operands bf16) ----------------------
    s_cn = s_b if Cn == Cr else jnp.broadcast_to(s, (R, Cn))
    x = nf_ref[...].astype(f32) * s_cn                                   # (R, Cn)
    x = _lrelu(mm(x, wg0_ref[...]) + row(B_G0, Cr))     # gcn Linear(node_in,roi)+LReLU
    x = mm(x, wsq_ref[0]) + row(B_G1, Cr)               # gcn Linear(roi, roi)
    x = bn_cols(x, BN1G, BN1B)                          # bn1
    x = x * s_b
    x = _lrelu(mm(x, wsq_ref[1]) + row(B_GC1, Cr))      # gcn1 Linear + LReLU
    x = bn_cols(x, BN2G, BN2B)                          # bn2
    x = x * s_b
    x = _lrelu(mm(x, wn_ref[O_G2A:O_G2A + Cr, :]) + row(B_G2A, NARROW))      # gcn2 Linear(.,64)
    x = _lrelu(mm(x, wn_ref[O_G2B:O_G2B + NARROW, :]) + row(B_G2B, NARROW))  # gcn2 Linear(64,8)
    # Columns >= 8 of x are exactly zero here (zero-padded weights / biases).

    # ---- bn3: BatchNorm1d(roi) on the (bz, roi, 8) view ----------------------
    # Accepted sublane->lane relayout; tiny at these shapes (per review note).
    x3 = x[:, :8].reshape(bz, roi, 8)
    n3 = bz * 8
    s3 = jnp.sum(x3, axis=(0, 2), keepdims=True)             # (1, roi, 1)
    q3 = jnp.sum(x3 * x3, axis=(0, 2), keepdims=True)
    mu3 = s3 / n3
    var3 = jnp.maximum(q3 / n3 - mu3 * mu3, 0.0)
    scale3 = jax.lax.rsqrt(var3 + EPS) * row(BN3G, roi).reshape(1, roi, 1)
    shift3 = row(BN3B, roi).reshape(1, roi, 1) - mu3 * scale3
    xf = (x3 * scale3 + shift3).reshape(bz, roi * 8)          # (bz, 8*roi)

    # ---- fcn head ------------------------------------------------------------
    xf = _lrelu(mm(xf, f1w_ref[...]) + row(F1B, 256))
    xf = _lrelu(mm(xf, wn_ref[O_F2:O_F2 + 256, :]) + row(F2B, NARROW))
    out_ref[...] = mm(xf, wn_ref[O_F3:O_F3 + NARROW, :]) + row(F3B, NARROW)


# ----------------------------------------------------------------------------
# One-time parameter packing (zero-pad to lane-dense widths, bf16 weights)
# ----------------------------------------------------------------------------
def pack_params(params, node_input_dim, roi_num, w_dtype=jnp.bfloat16):
    (g0w, g0b, g1w, g1b, bn1g, bn1b, gc1w, gc1b, bn2g, bn2b,
     g2aw, g2ab, g2bw, g2bb, bn3g, bn3b,
     f1w, f1b, f2w, f2b, f3w, f3b) = params

    Cn = _round_up(node_input_dim, LANE)
    Cr = _round_up(roi_num, LANE)
    Vw = max(Cr, 256)

    def pad_w(w, rows, cols):
        w = jnp.asarray(w, jnp.float32)
        r, c = w.shape
        return jnp.pad(w, ((0, rows - r), (0, cols - c))).astype(w_dtype)

    def pad_v(v):
        v = jnp.asarray(v, jnp.float32).reshape(1, -1)
        return jnp.pad(v, ((0, 0), (0, Vw - v.shape[1])))

    w_g0 = pad_w(g0w, Cn, Cr)                                        # (Cn, Cr)
    w_sq = jnp.stack([pad_w(g1w, Cr, Cr), pad_w(gc1w, Cr, Cr)])      # (2, Cr, Cr)
    # All 128-lane-output weights concatenated along their contraction axes;
    # statically row-sliced in the kernel (no CxC over-padding of narrow layers).
    w_n128 = jnp.concatenate([pad_w(g2aw, Cr, NARROW),       # rows [0, Cr)
                              pad_w(g2bw, NARROW, NARROW),   # rows [Cr, Cr+128)
                              pad_w(f2w, 256, NARROW),       # rows [Cr+128, Cr+384)
                              pad_w(f3w, NARROW, NARROW)],   # rows [Cr+384, Cr+512)
                             axis=0)
    # f1's K dim is 8*roi (always a multiple of 8); Mosaic masks when it is not a
    # multiple of the bf16 sublane tile (odd roi) -- block == full array, so OK.
    f1w_p = jnp.asarray(f1w, jnp.float32).astype(w_dtype)            # (8*roi, 256)

    vec_rows = [g0b, g1b, bn1g, bn1b, gc1b, bn2g, bn2b,
                g2ab, g2bb, f1b, f2b, f3b, bn3g, bn3b]
    vecs = jnp.concatenate(
        [pad_v(v) for v in vec_rows]
        + [jnp.zeros((N_VEC_ROWS - len(vec_rows), Vw), jnp.float32)], axis=0)

    return w_sq, w_g0, w_n128, f1w_p, vecs


# ----------------------------------------------------------------------------
# Wrapper
# ----------------------------------------------------------------------------
def gnn_predictor(m, node_feature, packed):
    w_sq, w_g0, w_n128, f1w, vecs = packed
    bz, roi, node_in = node_feature.shape
    R = bz * roi
    Cn, Cr = w_g0.shape
    wd = w_g0.dtype

    # Only the row-sum of the adjacency is ever needed by the model.
    s = jnp.sum(m, axis=-1).reshape(R, 1).astype(jnp.float32)
    nf = jnp.pad(node_feature.reshape(R, node_in).astype(jnp.float32),
                 ((0, 0), (0, Cn - node_in))).astype(wd)

    inputs = (s, nf, w_sq, w_g0, w_n128, f1w, vecs)
    in_bytes = sum(int(a.size) * a.dtype.itemsize for a in inputs)
    out_bytes = bz * NARROW * 4

    flops = (2 * R * (Cn * Cr + 2 * Cr * Cr + Cr * NARROW + NARROW * NARROW)
             + 8 * R * Cr                                      # fused BN stat dots
             + 2 * bz * (8 * roi * 256 + 256 * NARROW + NARROW * NARROW))

    try:
        vmem_cap = int(getattr(pltpu.get_tpu_info(), "vmem_capacity_bytes",
                               64 << 20))
    except Exception:  # conservative fallback if the query is unavailable
        vmem_cap = 64 << 20
    live_bytes = 6 * R * max(Cn, Cr) * 4       # a few live f32 (R,C)/(R,2C) slabs
    vmem_limit = int(min(in_bytes + out_bytes + live_bytes + (8 << 20), vmem_cap))

    vmem = pl.BlockSpec(memory_space=pltpu.MemorySpace.VMEM)
    out_p = pl.pallas_call(
        gnn_kernel,
        out_shape=jax.ShapeDtypeStruct((bz, NARROW), jnp.float32),
        in_specs=[vmem] * len(inputs),
        out_specs=vmem,
        compiler_params=pltpu.CompilerParams(vmem_limit_bytes=vmem_limit),
        cost_estimate=pl.CostEstimate(flops=flops,
                                      transcendentals=2 * Cr + roi,
                                      bytes_accessed=in_bytes + out_bytes),
    )(*inputs)
    return out_p[:, :2]


# ----------------------------------------------------------------------------
# Deterministic synthetic parameters (shapes follow the torch module)
# ----------------------------------------------------------------------------
def init_params(key, node_input_dim, roi_num):
    inner = roi_num

    def lin(k, fan_in, fan_out):
        kw, kb = jax.random.split(k)
        w = jax.random.normal(kw, (fan_in, fan_out), jnp.float32) * (1.0 / jnp.sqrt(fan_in))
        b = jax.random.normal(kb, (1, fan_out), jnp.float32) * 0.01
        return w, b

    keys = jax.random.split(key, 9)
    g0w, g0b = lin(keys[0], node_input_dim, inner)
    g1w, g1b = lin(keys[1], inner, inner)
    gc1w, gc1b = lin(keys[2], inner, inner)
    g2aw, g2ab = lin(keys[3], inner, 64)
    g2bw, g2bb = lin(keys[4], 64, 8)
    f1w, f1b = lin(keys[5], 8 * roi_num, 256)
    f2w, f2b = lin(keys[6], 256, 32)
    f3w, f3b = lin(keys[7], 32, 2)

    ones = lambda n: jnp.ones((1, n), jnp.float32)
    zeros = lambda n: jnp.zeros((1, n), jnp.float32)
    bn1g, bn1b = ones(inner), zeros(inner)
    bn2g, bn2b = ones(inner), zeros(inner)
    bn3g, bn3b = ones(inner), zeros(inner)

    return (g0w, g0b, g1w, g1b,
            bn1g, bn1b,
            gc1w, gc1b,
            bn2g, bn2b,
            g2aw, g2ab, g2bw, g2bb,
            bn3g, bn3b,
            f1w, f1b, f2w, f2b, f3w, f3b)


# ----------------------------------------------------------------------------
# Pure-JAX reference mirroring the torch forward.
#   mxu_dtype=None      -> faithful f32 reference
#   mxu_dtype=bfloat16  -> emulates the kernel's MXU precision policy
# ----------------------------------------------------------------------------
def reference_forward(m, nf, params, mxu_dtype=None):
    (g0w, g0b, g1w, g1b, bn1g, bn1b, gc1w, gc1b, bn2g, bn2b,
     g2aw, g2ab, g2bw, g2bb, bn3g, bn3b,
     f1w, f1b, f2w, f2b, f3w, f3b) = params
    bz, roi, _ = m.shape

    def mm(a, w):
        if mxu_dtype is not None:
            a = a.astype(mxu_dtype)
            w = jnp.asarray(w, jnp.float32).astype(mxu_dtype)
        return jnp.dot(a, w, preferred_element_type=jnp.float32)

    def bn_rows(x, g, b):
        mu = x.mean(0, keepdims=True)
        var = ((x - mu) ** 2).mean(0, keepdims=True)
        return (x - mu) / jnp.sqrt(var + EPS) * g + b

    nf = jnp.asarray(nf, jnp.float32)
    if mxu_dtype is not None:          # node features are stored bf16 in HBM
        nf = nf.astype(mxu_dtype).astype(jnp.float32)

    s = m.sum(-1, keepdims=True)
    x = nf * s
    x = _lrelu(mm(x, g0w) + g0b)
    x = mm(x, g1w) + g1b
    x = bn_rows(x.reshape(bz * roi, -1), bn1g, bn1b).reshape(bz, roi, -1)
    x = x * s
    x = _lrelu(mm(x, gc1w) + gc1b)
    x = bn_rows(x.reshape(bz * roi, -1), bn2g, bn2b).reshape(bz, roi, -1)
    x = x * s
    x = _lrelu(mm(x, g2aw) + g2ab)
    x = _lrelu(mm(x, g2bw) + g2bb)
    mu = x.mean(axis=(0, 2), keepdims=True)
    var = ((x - mu) ** 2).mean(axis=(0, 2), keepdims=True)
    x = (x - mu) / jnp.sqrt(var + EPS) * bn3g.reshape(1, roi, 1) + bn3b.reshape(1, roi, 1)
    x = x.reshape(bz, -1)
    x = _lrelu(mm(x, f1w) + f1b)
    x = _lrelu(mm(x, f2w) + f2b)
    return mm(x, f3w) + f3b


if __name__ == "__main__":
    bz, roi_num, node_input_dim = 2, 16, 32

    key = jax.random.PRNGKey(0)
    k_m, k_nf, k_p = jax.random.split(key, 3)
    m = jax.random.normal(k_m, (bz, roi_num, roi_num), jnp.float32)
    node_feature = jax.random.normal(k_nf, (bz, roi_num, node_input_dim), jnp.float32)
    params = init_params(k_p, node_input_dim, roi_num)

    packed = pack_params(params, node_input_dim, roi_num)      # bf16 weights
    out = jax.block_until_ready(gnn_predictor(m, node_feature, packed))
    assert out.shape == (bz, 2)

    # Check 1 (tight): reference with the same bf16-operand MXU precision policy.
    ref_mxu = jax.block_until_ready(
        reference_forward(m, node_feature, params, mxu_dtype=jnp.bfloat16))
    assert jnp.allclose(out, ref_mxu, atol=2e-3, rtol=2e-3), (out, ref_mxu)

    # Check 2 (loose): full-f32 torch-faithful reference; only guards against
    # structural errors — a few % deviation from bf16 matmuls is expected.
    ref_f32 = jax.block_until_ready(reference_forward(m, node_feature, params))
    assert jnp.allclose(out, ref_f32, atol=0.2, rtol=0.2), (out, ref_f32)

    print("KERNEL_OK")
</pallas_src>

<mosaic_0001>
module attributes {stable_mosaic.version = 11 : i64} {
  func.func @gnn_kernel(%arg0: memref<32x1xf32, #tpu.memory_space<vmem>>, %arg1: memref<32x128xbf16, #tpu.memory_space<vmem>>, %arg2: memref<2x128x128xbf16, #tpu.memory_space<vmem>>, %arg3: memref<128x128xbf16, #tpu.memory_space<vmem>>, %arg4: memref<640x128xbf16, #tpu.memory_space<vmem>>, %arg5: memref<128x256xbf16, #tpu.memory_space<vmem>>, %arg6: memref<16x256xf32, #tpu.memory_space<vmem>>, %arg7: memref<2x128xf32, #tpu.memory_space<vmem>>) attributes {dimension_semantics = [], scalar_prefetch = 0 : i64, scratch_operands = 0 : i64, tpu.core_type = #tpu.core_type<tc>} {
    %c0 = arith.constant 0 : index
    %c0_0 = arith.constant 0 : index
    %0 = vector.load %arg6[%c0, %c0_0] : memref<16x256xf32, #tpu.memory_space<vmem>>, vector<16x256xf32>
    %c0_1 = arith.constant 0 : index
    %c0_2 = arith.constant 0 : index
    %1 = vector.load %arg0[%c0_1, %c0_2] : memref<32x1xf32, #tpu.memory_space<vmem>>, vector<32x1xf32>
    %2 = vector.shape_cast %1 : vector<32x1xf32> to vector<32x1xf32>
    %3 = vector.broadcast %2 : vector<32x1xf32> to vector<32x128xf32>
    %cst = arith.constant 1.000000e+00 : f32
    %4 = vector.broadcast %cst : f32 to vector<1x32xf32>
    %c0_3 = arith.constant 0 : index
    %c0_4 = arith.constant 0 : index
    %5 = vector.load %arg1[%c0_3, %c0_4] : memref<32x128xbf16, #tpu.memory_space<vmem>>, vector<32x128xbf16>
    %6 = arith.extf %5 : vector<32x128xbf16> to vector<32x128xf32>
    %7 = arith.mulf %6, %3 : vector<32x128xf32>
    %c0_5 = arith.constant 0 : index
    %c0_6 = arith.constant 0 : index
    %8 = vector.load %arg3[%c0_5, %c0_6] : memref<128x128xbf16, #tpu.memory_space<vmem>>, vector<128x128xbf16>
    %9 = arith.truncf %7 : vector<32x128xf32> to vector<32x128xbf16>
    %cst_7 = arith.constant dense<0.000000e+00> : vector<32x128xf32>
    %10 = tpu.matmul %9, %8, %cst_7 {dimension_numbers = #tpu.dot_dimension_numbers<[1], [0], [0], [1], [0, 0, 1, 1], [], []>} : vector<32x128xbf16>, vector<128x128xbf16>, vector<32x128xf32> -> vector<32x128xf32>
    %11 = vector.extract_strided_slice %0 {offsets = [0, 0], sizes = [1, 128], strides = [1, 1]} : vector<16x256xf32> to vector<1x128xf32>
    %12 = vector.broadcast %11 : vector<1x128xf32> to vector<32x128xf32>
    %13 = arith.addf %10, %12 : vector<32x128xf32>
    %cst_8 = arith.constant 0.000000e+00 : f32
    %14 = vector.broadcast %cst_8 : f32 to vector<32x128xf32>
    %15 = arith.cmpf oge, %13, %14 : vector<32x128xf32>
    %cst_9 = arith.constant 2.000000e-01 : f32
    %16 = vector.broadcast %cst_9 : f32 to vector<32x128xf32>
    %17 = arith.mulf %16, %13 : vector<32x128xf32>
    %18 = arith.select %15, %13, %17 : vector<32x128xi1>, vector<32x128xf32>
    %c0_10 = arith.constant 0 : index
    %c0_11 = arith.constant 0 : index
    %c0_12 = arith.constant 0 : index
    %19 = vector.load %arg2[%c0_10, %c0_11, %c0_12] : memref<2x128x128xbf16, #tpu.memory_space<vmem>>, vector<1x128x128xbf16>
    %20 = vector.shape_cast %19 : vector<1x128x128xbf16> to vector<128x128xbf16>
    %21 = arith.truncf %18 : vector<32x128xf32> to vector<32x128xbf16>
    %cst_13 = arith.constant dense<0.000000e+00> : vector<32x128xf32>
    %22 = tpu.matmul %21, %20, %cst_13 {dimension_numbers = #tpu.dot_dimension_numbers<[1], [0], [0], [1], [0, 0, 1, 1], [], []>} : vector<32x128xbf16>, vector<128x128xbf16>, vector<32x128xf32> -> vector<32x128xf32>
    %23 = vector.extract_strided_slice %0 {offsets = [1, 0], sizes = [1, 128], strides = [1, 1]} : vector<16x256xf32> to vector<1x128xf32>
    %24 = vector.broadcast %23 : vector<1x128xf32> to vector<32x128xf32>
    %25 = arith.addf %22, %24 : vector<32x128xf32>
    %26 = arith.mulf %25, %25 : vector<32x128xf32>
    %27 = tpu.concatenate %25, %26 in 1 : vector<32x128xf32>, vector<32x128xf32> -> vector<32x256xf32>
    %cst_14 = arith.constant dense<0.000000e+00> : vector<1x256xf32>
    %28 = tpu.matmul %4, %27, %cst_14 {dimension_numbers = #tpu.dot_dimension_numbers<[1], [0], [0], [1], [0, 0, 1, 1], [], []>} : vector<1x32xf32>, vector<32x256xf32>, vector<1x256xf32> -> vector<1x256xf32>
    %29 = vector.extract_strided_slice %28 {offsets = [0, 0], sizes = [1, 128], strides = [1, 1]} : vector<1x256xf32> to vector<1x128xf32>
    %cst_15 = arith.constant 3.200000e+01 : f32
    %30 = vector.broadcast %cst_15 : f32 to vector<1x128xf32>
    %31 = arith.divf %29, %30 : vector<1x128xf32>
    %32 = vector.extract_strided_slice %28 {offsets = [0, 128], sizes = [1, 128], strides = [1, 1]} : vector<1x256xf32> to vector<1x128xf32>
    %cst_16 = arith.constant 3.200000e+01 : f32
    %33 = vector.broadcast %cst_16 : f32 to vector<1x128xf32>
    %34 = arith.divf %32, %33 : vector<1x128xf32>
    %35 = arith.mulf %31, %31 : vector<1x128xf32>
    %36 = arith.subf %34, %35 : vector<1x128xf32>
    %cst_17 = arith.constant 0.000000e+00 : f32
    %37 = vector.broadcast %cst_17 : f32 to vector<1x128xf32>
    %38 = arith.maximumf %36, %37 : vector<1x128xf32>
    %cst_18 = arith.constant 9.99999974E-6 : f32
    %39 = vector.broadcast %cst_18 : f32 to vector<1x128xf32>
    %40 = arith.addf %38, %39 : vector<1x128xf32>
    %41 = math.rsqrt %40 : vector<1x128xf32>
    %42 = vector.extract_strided_slice %0 {offsets = [2, 0], sizes = [1, 128], strides = [1, 1]} : vector<16x256xf32> to vector<1x128xf32>
    %43 = arith.mulf %41, %42 : vector<1x128xf32>
    %44 = vector.extract_strided_slice %0 {offsets = [3, 0], sizes = [1, 128], strides = [1, 1]} : vector<16x256xf32> to vector<1x128xf32>
    %45 = arith.mulf %31, %43 : vector<1x128xf32>
    %46 = arith.subf %44, %45 : vector<1x128xf32>
    %47 = vector.broadcast %43 : vector<1x128xf32> to vector<32x128xf32>
    %48 = arith.mulf %25, %47 : vector<32x128xf32>
    %49 = vector.broadcast %46 : vector<1x128xf32> to vector<32x128xf32>
    %50 = arith.addf %48, %49 : vector<32x128xf32>
    %51 = arith.mulf %50, %3 : vector<32x128xf32>
    %c1 = arith.constant 1 : index
    %c0_19 = arith.constant 0 : index
    %c0_20 = arith.constant 0 : index
    %52 = vector.load %arg2[%c1, %c0_19, %c0_20] : memref<2x128x128xbf16, #tpu.memory_space<vmem>>, vector<1x128x128xbf16>
    %53 = vector.shape_cast %52 : vector<1x128x128xbf16> to vector<128x128xbf16>
    %54 = arith.truncf %51 : vector<32x128xf32> to vector<32x128xbf16>
    %cst_21 = arith.constant dense<0.000000e+00> : vector<32x128xf32>
    %55 = tpu.matmul %54, %53, %cst_21 {dimension_numbers = #tpu.dot_dimension_numbers<[1], [0], [0], [1], [0, 0, 1, 1], [], []>} : vector<32x128xbf16>, vector<128x128xbf16>, vector<32x128xf32> -> vector<32x128xf32>
    %56 = vector.extract_strided_slice %0 {offsets = [4, 0], sizes = [1, 128], strides = [1, 1]} : vector<16x256xf32> to vector<1x128xf32>
    %57 = vector.broadcast %56 : vector<1x128xf32> to vector<32x128xf32>
    %58 = arith.addf %55, %57 : vector<32x128xf32>
    %cst_22 = arith.constant 0.000000e+00 : f32
    %59 = vector.broadcast %cst_22 : f32 to vector<32x128xf32>
    %60 = arith.cmpf oge, %58, %59 : vector<32x128xf32>
    %cst_23 = arith.constant 2.000000e-01 : f32
    %61 = vector.broadcast %cst_23 : f32 to vector<32x128xf32>
    %62 = arith.mulf %61, %58 : vector<32x128xf32>
    %63 = arith.select %60, %58, %62 : vector<32x128xi1>, vector<32x128xf32>
    %64 = arith.mulf %63, %63 : vector<32x128xf32>
    %65 = tpu.concatenate %63, %64 in 1 : vector<32x128xf32>, vector<32x128xf32> -> vector<32x256xf32>
    %cst_24 = arith.constant dense<0.000000e+00> : vector<1x256xf32>
    %66 = tpu.matmul %4, %65, %cst_24 {dimension_numbers = #tpu.dot_dimension_numbers<[1], [0], [0], [1], [0, 0, 1, 1], [], []>} : vector<1x32xf32>, vector<32x256xf32>, vector<1x256xf32> -> vector<1x256xf32>
    %67 = vector.extract_strided_slice %66 {offsets = [0, 0], sizes = [1, 128], strides = [1, 1]} : vector<1x256xf32> to vector<1x128xf32>
    %cst_25 = arith.constant 3.200000e+01 : f32
    %68 = vector.broadcast %cst_25 : f32 to vector<1x128xf32>
    %69 = arith.divf %67, %68 : vector<1x128xf32>
    %70 = vector.extract_strided_slice %66 {offsets = [0, 128], sizes = [1, 128], strides = [1, 1]} : vector<1x256xf32> to vector<1x128xf32>
    %cst_26 = arith.constant 3.200000e+01 : f32
    %71 = vector.broadcast %cst_26 : f32 to vector<1x128xf32>
    %72 = arith.divf %70, %71 : vector<1x128xf32>
    %73 = arith.mulf %69, %69 : vector<1x128xf32>
    %74 = arith.subf %72, %73 : vector<1x128xf32>
    %cst_27 = arith.constant 0.000000e+00 : f32
    %75 = vector.broadcast %cst_27 : f32 to vector<1x128xf32>
    %76 = arith.maximumf %74, %75 : vector<1x128xf32>
    %cst_28 = arith.constant 9.99999974E-6 : f32
    %77 = vector.broadcast %cst_28 : f32 to vector<1x128xf32>
    %78 = arith.addf %76, %77 : vector<1x128xf32>
    %79 = math.rsqrt %78 : vector<1x128xf32>
    %80 = vector.extract_strided_slice %0 {offsets = [5, 0], sizes = [1, 128], strides = [1, 1]} : vector<16x256xf32> to vector<1x128xf32>
    %81 = arith.mulf %79, %80 : vector<1x128xf32>
    %82 = vector.extract_strided_slice %0 {offsets = [6, 0], sizes = [1, 128], strides = [1, 1]} : vector<16x256xf32> to vector<1x128xf32>
    %83 = arith.mulf %69, %81 : vector<1x128xf32>
    %84 = arith.subf %82, %83 : vector<1x128xf32>
    %85 = vector.broadcast %81 : vector<1x128xf32> to vector<32x128xf32>
    %86 = arith.mulf %63, %85 : vector<32x128xf32>
    %87 = vector.broadcast %84 : vector<1x128xf32> to vector<32x128xf32>
    %88 = arith.addf %86, %87 : vector<32x128xf32>
    %89 = arith.mulf %88, %3 : vector<32x128xf32>
    %c0_29 = arith.constant 0 : index
    %c0_30 = arith.constant 0 : index
    %90 = vector.load %arg4[%c0_29, %c0_30] : memref<640x128xbf16, #tpu.memory_space<vmem>>, vector<128x128xbf16>
    %91 = arith.truncf %89 : vector<32x128xf32> to vector<32x128xbf16>
    %cst_31 = arith.constant dense<0.000000e+00> : vector<32x128xf32>
    %92 = tpu.matmul %91, %90, %cst_31 {dimension_numbers = #tpu.dot_dimension_numbers<[1], [0], [0], [1], [0, 0, 1, 1], [], []>} : vector<32x128xbf16>, vector<128x128xbf16>, vector<32x128xf32> -> vector<32x128xf32>
    %93 = vector.extract_strided_slice %0 {offsets = [7, 0], sizes = [1, 128], strides = [1, 1]} : vector<16x256xf32> to vector<1x128xf32>
    %94 = vector.broadcast %93 : vector<1x128xf32> to vector<32x128xf32>
    %95 = arith.addf %92, %94 : vector<32x128xf32>
    %cst_32 = arith.constant 0.000000e+00 : f32
    %96 = vector.broadcast %cst_32 : f32 to vector<32x128xf32>
    %97 = arith.cmpf oge, %95, %96 : vector<32x128xf32>
    %cst_33 = arith.constant 2.000000e-01 : f32
    %98 = vector.broadcast %cst_33 : f32 to vector<32x128xf32>
    %99 = arith.mulf %98, %95 : vector<32x128xf32>
    %100 = arith.select %97, %95, %99 : vector<32x128xi1>, vector<32x128xf32>
    %c128 = arith.constant 128 : index
    %c0_34 = arith.constant 0 : index
    %101 = vector.load %arg4[%c128, %c0_34] : memref<640x128xbf16, #tpu.memory_space<vmem>>, vector<128x128xbf16>
    %102 = arith.truncf %100 : vector<32x128xf32> to vector<32x128xbf16>
    %cst_35 = arith.constant dense<0.000000e+00> : vector<32x128xf32>
    %103 = tpu.matmul %102, %101, %cst_35 {dimension_numbers = #tpu.dot_dimension_numbers<[1], [0], [0], [1], [0, 0, 1, 1], [], []>} : vector<32x128xbf16>, vector<128x128xbf16>, vector<32x128xf32> -> vector<32x128xf32>
    %104 = vector.extract_strided_slice %0 {offsets = [8, 0], sizes = [1, 128], strides = [1, 1]} : vector<16x256xf32> to vector<1x128xf32>
    %105 = vector.broadcast %104 : vector<1x128xf32> to vector<32x128xf32>
    %106 = arith.addf %103, %105 : vector<32x128xf32>
    %cst_36 = arith.constant 0.000000e+00 : f32
    %107 = vector.broadcast %cst_36 : f32 to vector<32x128xf32>
    %108 = arith.cmpf oge, %106, %107 : vector<32x128xf32>
    %cst_37 = arith.constant 2.000000e-01 : f32
    %109 = vector.broadcast %cst_37 : f32 to vector<32x128xf32>
    %110 = arith.mulf %109, %106 : vector<32x128xf32>
    %111 = arith.select %108, %106, %110 : vector<32x128xi1>, vector<32x128xf32>
    %112 = vector.extract_strided_slice %111 {offsets = [0, 0], sizes = [32, 8], strides = [1, 1]} : vector<32x128xf32> to vector<32x8xf32>
    %113 = vector.shape_cast %112 : vector<32x8xf32> to vector<2x16x8xf32>
    %cst_38 = arith.constant dense<0.000000e+00> : vector<16xf32>
    %114 = vector.multi_reduction <add>, %113, %cst_38 [0, 2] : vector<2x16x8xf32> to vector<16xf32>
    %115 = vector.shape_cast %114 : vector<16xf32> to vector<1x16x1xf32>
    %116 = arith.mulf %113, %113 : vector<2x16x8xf32>
    %cst_39 = arith.constant dense<0.000000e+00> : vector<16xf32>
    %117 = vector.multi_reduction <add>, %116, %cst_39 [0, 2] : vector<2x16x8xf32> to vector<16xf32>
    %118 = vector.shape_cast %117 : vector<16xf32> to vector<1x16x1xf32>
    %cst_40 = arith.constant 1.600000e+01 : f32
    %119 = vector.broadcast %cst_40 : f32 to vector<1x16x1xf32>
    %120 = arith.divf %115, %119 : vector<1x16x1xf32>
    %cst_41 = arith.constant 1.600000e+01 : f32
    %121 = vector.broadcast %cst_41 : f32 to vector<1x16x1xf32>
    %122 = arith.divf %118, %121 : vector<1x16x1xf32>
    %123 = arith.mulf %120, %120 : vector<1x16x1xf32>
    %124 = arith.subf %122, %123 : vector<1x16x1xf32>
    %cst_42 = arith.constant 0.000000e+00 : f32
    %125 = vector.broadcast %cst_42 : f32 to vector<1x16x1xf32>
    %126 = arith.maximumf %124, %125 : vector<1x16x1xf32>
    %cst_43 = arith.constant 9.99999974E-6 : f32
    %127 = vector.broadcast %cst_43 : f32 to vector<1x16x1xf32>
    %128 = arith.addf %126, %127 : vector<1x16x1xf32>
    %129 = math.rsqrt %128 : vector<1x16x1xf32>
    %130 = vector.extract_strided_slice %0 {offsets = [12, 0], sizes = [1, 16], strides = [1, 1]} : vector<16x256xf32> to vector<1x16xf32>
    %131 = vector.shape_cast %130 : vector<1x16xf32> to vector<1x16x1xf32>
    %132 = arith.mulf %129, %131 : vector<1x16x1xf32>
    %133 = vector.extract_strided_slice %0 {offsets = [13, 0], sizes = [1, 16], strides = [1, 1]} : vector<16x256xf32> to vector<1x16xf32>
    %134 = vector.shape_cast %133 : vector<1x16xf32> to vector<1x16x1xf32>
    %135 = arith.mulf %120, %132 : vector<1x16x1xf32>
    %136 = arith.subf %134, %135 : vector<1x16x1xf32>
    %137 = vector.broadcast %132 : vector<1x16x1xf32> to vector<2x16x8xf32>
    %138 = arith.mulf %113, %137 : vector<2x16x8xf32>
    %139 = vector.broadcast %136 : vector<1x16x1xf32> to vector<2x16x8xf32>
    %140 = arith.addf %138, %139 : vector<2x16x8xf32>
    %141 = vector.shape_cast %140 : vector<2x16x8xf32> to vector<2x128xf32>
    %c0_44 = arith.constant 0 : index
    %c0_45 = arith.constant 0 : index
    %142 = vector.load %arg5[%c0_44, %c0_45] : memref<128x256xbf16, #tpu.memory_space<vmem>>, vector<128x256xbf16>
    %143 = arith.truncf %141 : vector<2x128xf32> to vector<2x128xbf16>
    %cst_46 = arith.constant dense<0.000000e+00> : vector<2x256xf32>
    %144 = tpu.matmul %143, %142, %cst_46 {dimension_numbers = #tpu.dot_dimension_numbers<[1], [0], [0], [1], [0, 0, 1, 1], [], []>} : vector<2x128xbf16>, vector<128x256xbf16>, vector<2x256xf32> -> vector<2x256xf32>
    %145 = vector.extract_strided_slice %0 {offsets = [9, 0], sizes = [1, 256], strides = [1, 1]} : vector<16x256xf32> to vector<1x256xf32>
    %146 = vector.broadcast %145 : vector<1x256xf32> to vector<2x256xf32>
    %147 = arith.addf %144, %146 : vector<2x256xf32>
    %cst_47 = arith.constant 0.000000e+00 : f32
    %148 = vector.broadcast %cst_47 : f32 to vector<2x256xf32>
    %149 = arith.cmpf oge, %147, %148 : vector<2x256xf32>
    %cst_48 = arith.constant 2.000000e-01 : f32
    %150 = vector.broadcast %cst_48 : f32 to vector<2x256xf32>
    %151 = arith.mulf %150, %147 : vector<2x256xf32>
    %152 = arith.select %149, %147, %151 : vector<2x256xi1>, vector<2x256xf32>
    %c256 = arith.constant 256 : index
    %c0_49 = arith.constant 0 : index
    %153 = vector.load %arg4[%c256, %c0_49] : memref<640x128xbf16, #tpu.memory_space<vmem>>, vector<256x128xbf16>
    %154 = arith.truncf %152 : vector<2x256xf32> to vector<2x256xbf16>
    %cst_50 = arith.constant dense<0.000000e+00> : vector<2x128xf32>
    %155 = tpu.matmul %154, %153, %cst_50 {dimension_numbers = #tpu.dot_dimension_numbers<[1], [0], [0], [1], [0, 0, 1, 1], [], []>} : vector<2x256xbf16>, vector<256x128xbf16>, vector<2x128xf32> -> vector<2x128xf32>
    %156 = vector.extract_strided_slice %0 {offsets = [10, 0], sizes = [1, 128], strides = [1, 1]} : vector<16x256xf32> to vector<1x128xf32>
    %157 = vector.broadcast %156 : vector<1x128xf32> to vector<2x128xf32>
    %158 = arith.addf %155, %157 : vector<2x128xf32>
    %cst_51 = arith.constant 0.000000e+00 : f32
    %159 = vector.broadcast %cst_51 : f32 to vector<2x128xf32>
    %160 = arith.cmpf oge, %158, %159 : vector<2x128xf32>
    %cst_52 = arith.constant 2.000000e-01 : f32
    %161 = vector.broadcast %cst_52 : f32 to vector<2x128xf32>
    %162 = arith.mulf %161, %158 : vector<2x128xf32>
    %163 = arith.select %160, %158, %162 : vector<2x128xi1>, vector<2x128xf32>
    %c512 = arith.constant 512 : index
    %c0_53 = arith.constant 0 : index
    %164 = vector.load %arg4[%c512, %c0_53] : memref<640x128xbf16, #tpu.memory_space<vmem>>, vector<128x128xbf16>
    %165 = arith.truncf %163 : vector<2x128xf32> to vector<2x128xbf16>
    %cst_54 = arith.constant dense<0.000000e+00> : vector<2x128xf32>
    %166 = tpu.matmul %165, %164, %cst_54 {dimension_numbers = #tpu.dot_dimension_numbers<[1], [0], [0], [1], [0, 0, 1, 1], [], []>} : vector<2x128xbf16>, vector<128x128xbf16>, vector<2x128xf32> -> vector<2x128xf32>
    %167 = vector.extract_strided_slice %0 {offsets = [11, 0], sizes = [1, 128], strides = [1, 1]} : vector<16x256xf32> to vector<1x128xf32>
    %168 = vector.broadcast %167 : vector<1x128xf32> to vector<2x128xf32>
    %169 = arith.addf %166, %168 : vector<2x128xf32>
    %c0_55 = arith.constant 0 : index
    %c0_56 = arith.constant 0 : index
    %170 = vector.load %arg7[%c0_55, %c0_56] : memref<2x128xf32, #tpu.memory_space<vmem>>, vector<2x128xf32>
    tpu.vector_store %arg7[%c0_55, %c0_56], %169 {strides = array<i32>} : memref<2x128xf32, #tpu.memory_space<vmem>>, vector<2x128xf32>,
    return
  }
}

</mosaic_0001>

<llo_original>
// kernel: tpu_custom_call.1
$region0: #{tpu_custom_call.1}
  #allocation0 [shape = 'u32[]', space=smem, size = 0x4, offset = 0x4, fixed_abs, tag = 'smem constant byte address 0x4 - core index']
  #allocation1 [shape = 'u32[144,128]{1,0:T(1,128)}', space=vmem, size = 0x12000, scoped, tag = 'internal scratch']
  %s0 = inlined_call_operand.vmem [shape: f32[32,1], index: 0, kind: input, shape index: {}]
  %s1 = inlined_call_operand.vmem [shape: bf16[32,128], index: 1, kind: input, shape index: {}]
  %s2 = inlined_call_operand.hbm [shape: bf16[2,128,128], index: 2, kind: input, shape index: {}]
  %s3 = inlined_call_operand.hbm [shape: bf16[128,128], index: 3, kind: input, shape index: {}]
  %s4 = inlined_call_operand.hbm [shape: bf16[640,128], index: 4, kind: input, shape index: {}]
  %s5 = inlined_call_operand.hbm [shape: bf16[128,256], index: 5, kind: input, shape index: {}]
  %s6 = inlined_call_operand.vmem [shape: f32[16,256], index: 6, kind: input, shape index: {}]
  %s7 = inlined_call_operand.hbm [shape: f32[2,128], index: 7, kind: output, shape index: {}]
  %s8 = sld [smem:[#allocation0]]
  $region54: #{tpu_custom_call.1} parent=0
    _
  %s10 = ssub.s32 1, %s8
  %s11 = scalar_select 0, %s10, %s8
  $region1: #{tpu_custom_call.1} parent=0
    #allocation2 [shape = 'u8[65536]{0}', space=vmem, size = 0x10000, scoped, tag = 'input window, operand 2, single buffered']
    #allocation3 [shape = 's32[1]{0}', space=sflag, size = 0x4, scoped, tag = 'scoped memory for tpu_custom_call.1']
    #allocation4 [shape = 's32[1]{0}', space=sflag, size = 0x4, scoped, tag = 'scoped memory for tpu_custom_call.1']
    #allocation5 [shape = 'u8[32768]{0}', space=vmem, size = 0x8000, scoped, tag = 'input window, operand 3, single buffered']
    #allocation6 [shape = 's32[1]{0}', space=sflag, size = 0x4, scoped, tag = 'scoped memory for tpu_custom_call.1']
    #allocation7 [shape = 'u8[163840]{0}', space=vmem, size = 0x28000, scoped, tag = 'input window, operand 4, single buffered']
    #allocation8 [shape = 'u8[65536]{0}', space=vmem, size = 0x10000, scoped, tag = 'input window, operand 5, single buffered']
    #allocation9 [shape = 's32[1]{0}', space=sflag, size = 0x4, scoped, tag = 'scoped memory for tpu_custom_call.1']
    #allocation10 [shape = 'u8[1024]{0}', space=vmem, size = 0x400, scoped, tag = 'output window, operand 0, single buffered']
    %12 = vsyncpa [#allocation3], 0
    %13 = vsyncpa [#allocation6], 0
    %14 = vsyncpa [#allocation9], 0
    %15 = vsyncpa [#allocation4], 0
    // Predicated region
    $region2: #{tpu_custom_call.1} parent=1 // pred_check
      _
    $region3: #{tpu_custom_call.1} parent=1 // pred_check_branch
      %17 = sbr.rel (0) target = $region5
    $region4: #{tpu_custom_call.1} parent=1 // pred_region
      _
    $region5: #{tpu_custom_call.1} parent=1 // pred_fallthru
      _
    // Predicated region
    $region6: #{tpu_custom_call.1} parent=1 // pred_check
      _
    $region7: #{tpu_custom_call.1} parent=1 // pred_check_branch
      %19 = sbr.rel (0) target = $region9
    $region8: #{tpu_custom_call.1} parent=1 // pred_region
      _
    $region9: #{tpu_custom_call.1} parent=1 // pred_fallthru
      _
    // Predicated region
    $region10: #{tpu_custom_call.1} parent=1 // pred_check
      _
    $region11: #{tpu_custom_call.1} parent=1 // pred_check_branch
      %21 = sbr.rel (0) target = $region13
    $region12: #{tpu_custom_call.1} parent=1 // pred_region
      %s23 = ssub.s32 2048, 2048
      %24 = vsyncadd [#allocation3], %s23
      %s25 = sshll.u32 [#allocation2], 4
      %s26 = int_to_ptr.vmem [resolvable:$true] %s25
      %31 = dma.hbm_to_vmem [thread:$0]  %s2, 2048, %s26, [#allocation3], 64, 64, 4
    $region13: #{tpu_custom_call.1} parent=1 // pred_fallthru
      _
    // Predicated region
    $region14: #{tpu_custom_call.1} parent=1 // pred_check
      _
    $region15: #{tpu_custom_call.1} parent=1 // pred_check_branch
      %33 = sbr.rel (0) target = $region17
    $region16: #{tpu_custom_call.1} parent=1 // pred_region
      %s35 = ssub.s32 1024, 1024
      %36 = vsyncadd [#allocation6], %s35
      %s37 = sshll.u32 [#allocation5], 4
      %s38 = int_to_ptr.vmem [resolvable:$true] %s37
      %43 = dma.hbm_to_vmem [thread:$0]  %s3, 1024, %s38, [#allocation6], 64, 64, 4
    $region17: #{tpu_custom_call.1} parent=1 // pred_fallthru
      _
    // Predicated region
    $region18: #{tpu_custom_call.1} parent=1 // pred_check
      _
    $region19: #{tpu_custom_call.1} parent=1 // pred_check_branch
      %45 = sbr.rel (0) target = $region21
    $region20: #{tpu_custom_call.1} parent=1 // pred_region
      %s47 = ssub.s32 5120, 5120
      %48 = vsyncadd [#allocation6], %s47
      %s49 = sshll.u32 [#allocation7], 4
      %s50 = int_to_ptr.vmem [resolvable:$true] %s49
      %55 = dma.hbm_to_vmem [thread:$0]  %s4, 5120, %s50, [#allocation6], 64, 64, 4
    $region21: #{tpu_custom_call.1} parent=1 // pred_fallthru
      _
    // Predicated region
    $region22: #{tpu_custom_call.1} parent=1 // pred_check
      _
    $region23: #{tpu_custom_call.1} parent=1 // pred_check_branch
      %57 = sbr.rel (0) target = $region25
    $region24: #{tpu_custom_call.1} parent=1 // pred_region
      %s59 = ssub.s32 2048, 2048
      %60 = vsyncadd [#allocation9], %s59
      %s61 = sshll.u32 [#allocation8], 4
      %s62 = int_to_ptr.vmem [resolvable:$true] %s61
      %67 = dma.hbm_to_vmem [thread:$0]  %s5, 2048, %s62, [#allocation9], 128, 128, 8
    $region25: #{tpu_custom_call.1} parent=1 // pred_fallthru
      _
    // Predicated region
    $region26: #{tpu_custom_call.1} parent=1 // pred_check
      _
    $region27: #{tpu_custom_call.1} parent=1 // pred_check_branch
      %69 = sbr.rel (0) target = $region29
    $region28: #{tpu_custom_call.1} parent=1 // pred_region
      _
    $region29: #{tpu_custom_call.1} parent=1 // pred_fallthru
      _
    // Predicated region
    $region30: #{tpu_custom_call.1} parent=1 // pred_check
      _
    $region31: #{tpu_custom_call.1} parent=1 // pred_check_branch
      %71 = sbr.rel (0) target = $region33
    $region32: #{tpu_custom_call.1} parent=1 // pred_region
      %72 = dma.done [#allocation3], 2048
    $region33: #{tpu_custom_call.1} parent=1 // pred_fallthru
      _
    // Predicated region
    $region34: #{tpu_custom_call.1} parent=1 // pred_check
      _
    $region35: #{tpu_custom_call.1} parent=1 // pred_check_branch
      %74 = sbr.rel (0) target = $region37
    $region36: #{tpu_custom_call.1} parent=1 // pred_region
      %75 = dma.done [#allocation6], 1024
    $region37: #{tpu_custom_call.1} parent=1 // pred_fallthru
      _
    // Predicated region
    $region38: #{tpu_custom_call.1} parent=1 // pred_check
      _
    $region39: #{tpu_custom_call.1} parent=1 // pred_check_branch
      %77 = sbr.rel (0) target = $region41
    $region40: #{tpu_custom_call.1} parent=1 // pred_region
      %78 = dma.done [#allocation6], 5120
    $region41: #{tpu_custom_call.1} parent=1 // pred_fallthru
      _
    // Predicated region
    $region42: #{tpu_custom_call.1} parent=1 // pred_check
      _
    $region43: #{tpu_custom_call.1} parent=1 // pred_check_branch
      %80 = sbr.rel (0) target = $region45
    $region44: #{tpu_custom_call.1} parent=1 // pred_region
      %81 = dma.done [#allocation9], 2048
    $region45: #{tpu_custom_call.1} parent=1 // pred_fallthru
      _
    %v83 = vld [vmem:[%s6] sm:$0xff]
    %v84 = vld [vmem:[%s6 + $0x10] sm:$0xff]
    %v85 = vld [vmem:[%s6 + $0x18] sm:$0xff]
    %v86 = vld [vmem:[%s0] sm:$0xff]
    %v87 = vld [vmem:[%s0 + $0x8] sm:$0xff]
    %v88 = vld [vmem:[%s0 + $0x10] sm:$0xff]
    %v89 = vld [vmem:[%s0 + $0x18] sm:$0xff]
    %91 = vset.pattern.permute.xlu0 0
    %92 = vperm.xlu0 %91, %v86
    %v93 = vpop.permute.xlu0 %92
    %96 = vset.pattern.permute.xlu0 0
    %97 = vperm.xlu0 %96, %v87
    %v98 = vpop.permute.xlu0 %97
    %101 = vset.pattern.permute.xlu0 0
    %102 = vperm.xlu0 %101, %v88
    %v103 = vpop.permute.xlu0 %102
    %106 = vset.pattern.permute.xlu0 0
    %107 = vperm.xlu0 %106, %v89
    %v108 = vpop.permute.xlu0 %107
    %v110 = vld [vmem:[%s1] sm:$0xf]
    %v111 = vld [vmem:[%s1 + $0x4] sm:$0xf]
    %v112 = vld [vmem:[%s1 + $0x8] sm:$0xf]
    %v113 = vld [vmem:[%s1 + $0xc] sm:$0xf]
    %v114 = vunpack.c.l.bf16 %v110
    %v115 = vunpack.c.l.bf16 %v111
    %v116 = vunpack.c.l.bf16 %v112
    %v117 = vunpack.c.l.bf16 %v113
    %v118 = vmul.f32 %v114, %v93
    %v119 = vmul.f32 %v115, %v98
    %v120 = vmul.f32 %v116, %v103
    %v121 = vmul.f32 %v117, %v108
    %v122 = vld [vmem:[#allocation5] sm:$0xf]
    %v123 = vld [vmem:[#allocation5 + $0x4] sm:$0xf]
    %v124 = vld [vmem:[#allocation5 + $0x8] sm:$0xf]
    %v125 = vld [vmem:[#allocation5 + $0xc] sm:$0xf]
    %v126 = vld [vmem:[#allocation5 + $0x10] sm:$0xf]
    %v127 = vld [vmem:[#allocation5 + $0x14] sm:$0xf]
    %v128 = vld [vmem:[#allocation5 + $0x18] sm:$0xf]
    %v129 = vld [vmem:[#allocation5 + $0x1c] sm:$0xf]
    %v130 = vld [vmem:[#allocation5 + $0x20] sm:$0xf]
    %v131 = vld [vmem:[#allocation5 + $0x24] sm:$0xf]
    %v132 = vld [vmem:[#allocation5 + $0x28] sm:$0xf]
    %v133 = vld [vmem:[#allocation5 + $0x2c] sm:$0xf]
    %v134 = vld [vmem:[#allocation5 + $0x30] sm:$0xf]
    %v135 = vld [vmem:[#allocation5 + $0x34] sm:$0xf]
    %v136 = vld [vmem:[#allocation5 + $0x38] sm:$0xf]
    %v137 = vld [vmem:[#allocation5 + $0x3c] sm:$0xf]
    %v138 = vpack.c.bf16 %v119, %v118
    %v139 = vpack.c.bf16 %v121, %v120
    %v140 = vlaneseq
    %v141 = vshrl.u32 %v140, 7
    %v142 = vsub.s32 0, %v141
    %v143 = vrot.slane %v83, %v142
    %v160 = vunpack.c.l.b16 %v122
    %v161 = vunpack.c.l.b16 %v123
    %v162 = vunpack.c.l.b16 %v124
    %v163 = vunpack.c.l.b16 %v125
    %v164 = vunpack.c.l.b16 %v126
    %v165 = vunpack.c.l.b16 %v127
    %v166 = vunpack.c.l.b16 %v128
    %v167 = vunpack.c.l.b16 %v129
    %v168 = vunpack.c.l.b16 %v130
    %v169 = vunpack.c.l.b16 %v131
    %v170 = vunpack.c.l.b16 %v132
    %v171 = vunpack.c.l.b16 %v133
    %v172 = vunpack.c.l.b16 %v134
    %v173 = vunpack.c.l.b16 %v135
    %v174 = vunpack.c.l.b16 %v136
    %v175 = vunpack.c.l.b16 %v137
    %v176 = vpack.c.b16 %v161, %v160
    %v177 = vpack.c.b16 %v163, %v162
    %v178 = vpack.c.b16 %v165, %v164
    %v179 = vpack.c.b16 %v167, %v166
    %v180 = vpack.c.b16 %v169, %v168
    %v181 = vpack.c.b16 %v171, %v170
    %v182 = vpack.c.b16 %v173, %v172
    %v183 = vpack.c.b16 %v175, %v174
    %192 = vmatprep.subr.bf16.mxu0 0
    %193 = vmatpush1.bf16.msra.mxu0 %v176
    %194 = vmatprep.subr.bf16.mxu0 0
    %195 = vmatpush1.bf16.msra.mxu0 %v177
    %196 = vmatprep.subr.bf16.mxu0 0
    %197 = vmatpush1.bf16.msra.mxu0 %v178
    %198 = vmatprep.subr.bf16.mxu0 0
    %199 = vmatpush1.bf16.msra.mxu0 %v179
    %200 = vmatprep.subr.bf16.mxu0 0
    %201 = vmatpush1.bf16.msra.mxu0 %v180
    %202 = vmatprep.subr.bf16.mxu0 0
    %203 = vmatpush1.bf16.msra.mxu0 %v181
    %204 = vmatprep.subr.bf16.mxu0 0
    %205 = vmatpush1.bf16.msra.mxu0 %v182
    %206 = vmatprep.subr.bf16.mxu0 0
    %207 = vmatpush1.bf16.msra.mxu0 %v183
    %208 = vmatprep.subr.bf16.mxu0 0
    %209 = vmatpush1.bf16.msra.mxu0 0
    %210 = vmatprep.subr.bf16.mxu0 0
    %211 = vmatpush1.bf16.msra.mxu0 0
    %212 = vmatprep.subr.bf16.mxu0 0
    %213 = vmatpush1.bf16.msra.mxu0 0
    %214 = vmatprep.subr.bf16.mxu0 0
    %215 = vmatpush1.bf16.msra.mxu0 0
    %216 = vmatprep.subr.bf16.mxu0 0
    %217 = vmatpush1.bf16.msra.mxu0 0
    %218 = vmatprep.subr.bf16.mxu0 0
    %219 = vmatpush1.bf16.msra.mxu0 0
    %220 = vmatprep.subr.bf16.mxu0 0
    %221 = vmatpush1.bf16.msra.mxu0 0
    %222 = vmatprep.subr.bf16.mxu0 0
    %223 = vmatpush1.bf16.msra.mxu0 0
    %224 = vmatprep.mubr.bf16.mxu0 0
    %225 = vmatmul.mubr.bf16.gmra.mrb[0].mxu0 %v138
    %v226 = vpop.f32.mrb[0].mxu0
    %v227 = vadd.f32 %v143, %v226
    %v228 = vpop.f32.mrb[0].mxu0
    %v229 = vpop.f32.mrb[0].mxu0
    %v230 = vadd.f32 %v143, %v229
    %v231 = vpop.f32.mrb[0].mxu0
    %232 = vmatprep.mubr.bf16.mxu0 0
    %233 = vmatmul.mubr.bf16.gmra.mrb[0].mxu0 %v139
    %v234 = vpop.f32.mrb[0].mxu0
    %v235 = vadd.f32 %v143, %v234
    %v236 = vpop.f32.mrb[0].mxu0
    %v237 = vpop.f32.mrb[0].mxu0
    %v238 = vadd.f32 %v143, %v237
    %v239 = vpop.f32.mrb[0].mxu0
    %240 = vdwg.mxu0
    %vm241 = vcmp.ge.f32.partialorder %v227, 0.0
    %vm242 = vcmp.ge.f32.partialorder %v230, 0.0
    %vm243 = vcmp.ge.f32.partialorder %v235, 0.0
    %vm244 = vcmp.ge.f32.partialorder %v238, 0.0
    %v245 = vmul.f32 %v227, 0.2
    %v246 = vmul.f32 %v230, 0.2
    %v247 = vmul.f32 %v235, 0.2
    %v248 = vmul.f32 %v238, 0.2
    %v249 = vsel %vm241, %v227, %v245
    %v250 = vsel %vm242, %v230, %v246
    %v251 = vsel %vm243, %v235, %v247
    %v252 = vsel %vm244, %v238, %v248
    %v253 = vld [vmem:[#allocation2] sm:$0xf]
    %v254 = vld [vmem:[#allocation2 + $0x4] sm:$0xf]
    %v255 = vld [vmem:[#allocation2 + $0x8] sm:$0xf]
    %v256 = vld [vmem:[#allocation2 + $0xc] sm:$0xf]
    %v257 = vld [vmem:[#allocation2 + $0x10] sm:$0xf]
    %v258 = vld [vmem:[#allocation2 + $0x14] sm:$0xf]
    %v259 = vld [vmem:[#allocation2 + $0x18] sm:$0xf]
    %v260 = vld [vmem:[#allocation2 + $0x1c] sm:$0xf]
    %v261 = vld [vmem:[#allocation2 + $0x20] sm:$0xf]
    %v262 = vld [vmem:[#allocation2 + $0x24] sm:$0xf]
    %v263 = vld [vmem:[#allocation2 + $0x28] sm:$0xf]
    %v264 = vld [vmem:[#allocation2 + $0x2c] sm:$0xf]
    %v265 = vld [vmem:[#allocation2 + $0x30] sm:$0xf]
    %v266 = vld [vmem:[#allocation2 + $0x34] sm:$0xf]
    %v267 = vld [vmem:[#allocation2 + $0x38] sm:$0xf]
    %v268 = vld [vmem:[#allocation2 + $0x3c] sm:$0xf]
    %v269 = vpack.c.bf16 %v250, %v249
    %v270 = vpack.c.bf16 %v252, %v251
    %v271 = vlaneseq
    %v272 = vshrl.u32 %v271, 7
    %v273 = vsub.s32 1, %v272
    %v274 = vrot.slane %v83, %v273
    %v291 = vunpack.c.l.b16 %v253
    %v292 = vunpack.c.l.b16 %v254
    %v293 = vunpack.c.l.b16 %v255
    %v294 = vunpack.c.l.b16 %v256
    %v295 = vunpack.c.l.b16 %v257
    %v296 = vunpack.c.l.b16 %v258
    %v297 = vunpack.c.l.b16 %v259
    %v298 = vunpack.c.l.b16 %v260
    %v299 = vunpack.c.l.b16 %v261
    %v300 = vunpack.c.l.b16 %v262
    %v301 = vunpack.c.l.b16 %v263
    %v302 = vunpack.c.l.b16 %v264
    %v303 = vunpack.c.l.b16 %v265
    %v304 = vunpack.c.l.b16 %v266
    %v305 = vunpack.c.l.b16 %v267
    %v306 = vunpack.c.l.b16 %v268
    %v307 = vpack.c.b16 %v292, %v291
    %v308 = vpack.c.b16 %v294, %v293
    %v309 = vpack.c.b16 %v296, %v295
    %v310 = vpack.c.b16 %v298, %v297
    %v311 = vpack.c.b16 %v300, %v299
    %v312 = vpack.c.b16 %v302, %v301
    %v313 = vpack.c.b16 %v304, %v303
    %v314 = vpack.c.b16 %v306, %v305
    %323 = vmatprep.subr.bf16.mxu0 0
    %324 = vmatpush1.bf16.msra.mxu0 %v307
    %325 = vmatprep.subr.bf16.mxu0 0
    %326 = vmatpush1.bf16.msra.mxu0 %v308
    %327 = vmatprep.subr.bf16.mxu0 0
    %328 = vmatpush1.bf16.msra.mxu0 %v309
    %329 = vmatprep.subr.bf16.mxu0 0
    %330 = vmatpush1.bf16.msra.mxu0 %v310
    %331 = vmatprep.subr.bf16.mxu0 0
    %332 = vmatpush1.bf16.msra.mxu0 %v311
    %333 = vmatprep.subr.bf16.mxu0 0
    %334 = vmatpush1.bf16.msra.mxu0 %v312
    %335 = vmatprep.subr.bf16.mxu0 0
    %336 = vmatpush1.bf16.msra.mxu0 %v313
    %337 = vmatprep.subr.bf16.mxu0 0
    %338 = vmatpush1.bf16.msra.mxu0 %v314
    %339 = vmatprep.subr.bf16.mxu0 0
    %340 = vmatpush1.bf16.msra.mxu0 0
    %341 = vmatprep.subr.bf16.mxu0 0
    %342 = vmatpush1.bf16.msra.mxu0 0
    %343 = vmatprep.subr.bf16.mxu0 0
    %344 = vmatpush1.bf16.msra.mxu0 0
    %345 = vmatprep.subr.bf16.mxu0 0
    %346 = vmatpush1.bf16.msra.mxu0 0
    %347 = vmatprep.subr.bf16.mxu0 0
    %348 = vmatpush1.bf16.msra.mxu0 0
    %349 = vmatprep.subr.bf16.mxu0 0
    %350 = vmatpush1.bf16.msra.mxu0 0
    %351 = vmatprep.subr.bf16.mxu0 0
    %352 = vmatpush1.bf16.msra.mxu0 0
    %353 = vmatprep.subr.bf16.mxu0 0
    %354 = vmatpush1.bf16.msra.mxu0 0
    %355 = vmatprep.mubr.bf16.mxu0 0
    %356 = vmatmul.mubr.bf16.gmra.mrb[0].mxu0 %v269
    %v357 = vpop.f32.mrb[0].mxu0
    %v358 = vadd.f32 %v274, %v357
    %v359 = vpop.f32.mrb[0].mxu0
    %v360 = vpop.f32.mrb[0].mxu0
    %v361 = vadd.f32 %v274, %v360
    %v362 = vpop.f32.mrb[0].mxu0
    %363 = vmatprep.mubr.bf16.mxu0 0
    %364 = vmatmul.mubr.bf16.gmra.mrb[0].mxu0 %v270
    %v365 = vpop.f32.mrb[0].mxu0
    %v366 = vadd.f32 %v274, %v365
    %v367 = vpop.f32.mrb[0].mxu0
    %v368 = vpop.f32.mrb[0].mxu0
    %v369 = vadd.f32 %v274, %v368
    %v370 = vpop.f32.mrb[0].mxu0
    %371 = vdwg.mxu0
    %v372 = vmul.f32 %v358, %v358
    %v373 = vmul.f32 %v361, %v361
    %v374 = vmul.f32 %v366, %v366
    %v375 = vmul.f32 %v369, %v369
    %vm376 = vcmask 261120
    %v378 = vsel %vm376, 1.0, 0
    %380 = vmatprep.subr.mxu0 %v372
    %381 = vmatpush1.msra.mxu0 %v358
    %382 = vmatprep.subr.mxu0 %v373
    %383 = vmatpush1.msra.mxu0 %v361
    %384 = vmatprep.subr.mxu0 %v374
    %385 = vmatpush1.msra.mxu0 %v366
    %386 = vmatprep.subr.mxu0 %v375
    %387 = vmatpush1.msra.mxu0 %v369
    %388 = vmatprep.subr.mxu0 0.0
    %389 = vmatpush1.msra.mxu0 0.0
    %390 = vmatprep.subr.mxu0 0.0
    %391 = vmatpush1.msra.mxu0 0.0
    %392 = vmatprep.subr.mxu0 0.0
    %393 = vmatpush1.msra.mxu0 0.0
    %394 = vmatprep.subr.mxu0 0.0
    %395 = vmatpush1.msra.mxu0 0.0
    %396 = vmatprep.subr.mxu0 0.0
    %397 = vmatpush1.msra.mxu0 0.0
    %398 = vmatprep.subr.mxu0 0.0
    %399 = vmatpush1.msra.mxu0 0.0
    %400 = vmatprep.subr.mxu0 0.0
    %401 = vmatpush1.msra.mxu0 0.0
    %402 = vmatprep.subr.mxu0 0.0
    %403 = vmatpush1.msra.mxu0 0.0
    %404 = vmatprep.subr.mxu0 0.0
    %405 = vmatpush1.msra.mxu0 0.0
    %406 = vmatprep.subr.mxu0 0.0
    %407 = vmatpush1.msra.mxu0 0.0
    %408 = vmatprep.subr.mxu0 0.0
    %409 = vmatpush1.msra.mxu0 0.0
    %410 = vmatprep.subr.mxu0 0.0
    %411 = vmatpush1.msra.mxu0 0.0
    %412 = vmatprep.subr.mxu0 0.0
    %413 = vmatpush1.msra.mxu0 0.0
    %414 = vmatprep.subr.mxu0 0.0
    %415 = vmatpush1.msra.mxu0 0.0
    %416 = vmatprep.subr.mxu0 0.0
    %417 = vmatpush1.msra.mxu0 0.0
    %418 = vmatprep.subr.mxu0 0.0
    %419 = vmatpush1.msra.mxu0 0.0
    %420 = vmatprep.subr.mxu0 0.0
    %421 = vmatpush1.msra.mxu0 0.0
    %422 = vmatprep.subr.mxu0 0.0
    %423 = vmatpush1.msra.mxu0 0.0
    %424 = vmatprep.subr.mxu0 0.0
    %425 = vmatpush1.msra.mxu0 0.0
    %426 = vmatprep.subr.mxu0 0.0
    %427 = vmatpush1.msra.mxu0 0.0
    %428 = vmatprep.subr.mxu0 0.0
    %429 = vmatpush1.msra.mxu0 0.0
    %430 = vmatprep.subr.mxu0 0.0
    %431 = vmatpush1.msra.mxu0 0.0
    %432 = vmatprep.subr.mxu0 0.0
    %433 = vmatpush1.msra.mxu0 0.0
    %434 = vmatprep.subr.mxu0 0.0
    %435 = vmatpush1.msra.mxu0 0.0
    %436 = vmatprep.subr.mxu0 0.0
    %437 = vmatpush1.msra.mxu0 0.0
    %438 = vmatprep.subr.mxu0 0.0
    %439 = vmatpush1.msra.mxu0 0.0
    %440 = vmatprep.subr.mxu0 0.0
    %441 = vmatpush1.msra.mxu0 0.0
    %442 = vmatprep.subr.mxu0 0.0
    %443 = vmatpush1.msra.mxu0 0.0
    %444 = vmatprep.mubr.f32.mxu0 0.0
    %445 = vmatmul.mubr.f32.gmra.mrb[0].mxu0 %v378
    %v446 = vpop.f32.mrb[0].mxu0
    %v447 = vadd.f32 0.0, %v446
    %v448 = vpop.f32.mrb[0].mxu0
    %v449 = vadd.f32 0.0, %v448
    %450 = vdwg.mxu0
    %v451 = vrcp.pop 32.0
    %v452 = vmul.f32 %v447, %v451
    %v453 = vmul.f32 %v449, %v451
    %v454 = vmul.f32 %v452, %v452
    %v455 = vsub.f32 %v453, %v454
    %v456 = vmax.f32 %v455, 0.0
    %v457 = vadd.f32 %v456, 1e-05
    %v458 = vrsqrt.pop %v457
    %v460 = vrot.slane %v83, 2
    %v462 = vmul.f32 %v458, %v460
    %v463 = vmul.f32 %v452, %v462
    %v465 = vrot.slane %v463, 5
    %v467 = vsub.f32 %v83, %v465
    %v468 = vlaneseq
    %v469 = vshrl.u32 %v468, 7
    %v470 = vsub.s32 0, %v469
    %v471 = vrot.slane %v462, %v470
    %v472 = vmul.f32 %v358, %v471
    %v473 = vmul.f32 %v361, %v471
    %v474 = vmul.f32 %v366, %v471
    %v475 = vmul.f32 %v369, %v471
    %v476 = vlaneseq
    %v477 = vshrl.u32 %v476, 7
    %v478 = vsub.s32 3, %v477
    %v479 = vrot.slane %v467, %v478
    %v480 = vadd.f32 %v472, %v479
    %v481 = vadd.f32 %v473, %v479
    %v482 = vadd.f32 %v474, %v479
    %v483 = vadd.f32 %v475, %v479
    %v484 = vmul.f32 %v480, %v93
    %v485 = vmul.f32 %v481, %v98
    %v486 = vmul.f32 %v482, %v103
    %v487 = vmul.f32 %v483, %v108
    %s488 = scalar_lea.vmem [#allocation2], 64
    %v489 = vld [vmem:[%s488] sm:$0xf]
    %v490 = vld [vmem:[%s488 + $0x4] sm:$0xf]
    %v491 = vld [vmem:[%s488 + $0x8] sm:$0xf]
    %v492 = vld [vmem:[%s488 + $0xc] sm:$0xf]
    %v493 = vld [vmem:[%s488 + $0x10] sm:$0xf]
    %v494 = vld [vmem:[%s488 + $0x14] sm:$0xf]
    %v495 = vld [vmem:[%s488 + $0x18] sm:$0xf]
    %v496 = vld [vmem:[%s488 + $0x1c] sm:$0xf]
    %v497 = vld [vmem:[%s488 + $0x20] sm:$0xf]
    %v498 = vld [vmem:[%s488 + $0x24] sm:$0xf]
    %v499 = vld [vmem:[%s488 + $0x28] sm:$0xf]
    %v500 = vld [vmem:[%s488 + $0x2c] sm:$0xf]
    %v501 = vld [vmem:[%s488 + $0x30] sm:$0xf]
    %v502 = vld [vmem:[%s488 + $0x34] sm:$0xf]
    %v503 = vld [vmem:[%s488 + $0x38] sm:$0xf]
    %v504 = vld [vmem:[%s488 + $0x3c] sm:$0xf]
    %v505 = vpack.c.bf16 %v485, %v484
    %v506 = vpack.c.bf16 %v487, %v486
    %v507 = vlaneseq
    %v508 = vshrl.u32 %v507, 7
    %v509 = vsub.s32 4, %v508
    %v510 = vrot.slane %v83, %v509
    %v527 = vunpack.c.l.b16 %v489
    %v528 = vunpack.c.l.b16 %v490
    %v529 = vunpack.c.l.b16 %v491
    %v530 = vunpack.c.l.b16 %v492
    %v531 = vunpack.c.l.b16 %v493
    %v532 = vunpack.c.l.b16 %v494
    %v533 = vunpack.c.l.b16 %v495
    %v534 = vunpack.c.l.b16 %v496
    %v535 = vunpack.c.l.b16 %v497
    %v536 = vunpack.c.l.b16 %v498
    %v537 = vunpack.c.l.b16 %v499
    %v538 = vunpack.c.l.b16 %v500
    %v539 = vunpack.c.l.b16 %v501
    %v540 = vunpack.c.l.b16 %v502
    %v541 = vunpack.c.l.b16 %v503
    %v542 = vunpack.c.l.b16 %v504
    %v543 = vpack.c.b16 %v528, %v527
    %v544 = vpack.c.b16 %v530, %v529
    %v545 = vpack.c.b16 %v532, %v531
    %v546 = vpack.c.b16 %v534, %v533
    %v547 = vpack.c.b16 %v536, %v535
    %v548 = vpack.c.b16 %v538, %v537
    %v549 = vpack.c.b16 %v540, %v539
    %v550 = vpack.c.b16 %v542, %v541
    %559 = vmatprep.subr.bf16.mxu0 0
    %560 = vmatpush1.bf16.msra.mxu0 %v543
    %561 = vmatprep.subr.bf16.mxu0 0
    %562 = vmatpush1.bf16.msra.mxu0 %v544
    %563 = vmatprep.subr.bf16.mxu0 0
    %564 = vmatpush1.bf16.msra.mxu0 %v545
    %565 = vmatprep.subr.bf16.mxu0 0
    %566 = vmatpush1.bf16.msra.mxu0 %v546
    %567 = vmatprep.subr.bf16.mxu0 0
    %568 = vmatpush1.bf16.msra.mxu0 %v547
    %569 = vmatprep.subr.bf16.mxu0 0
    %570 = vmatpush1.bf16.msra.mxu0 %v548
    %571 = vmatprep.subr.bf16.mxu0 0
    %572 = vmatpush1.bf16.msra.mxu0 %v549
    %573 = vmatprep.subr.bf16.mxu0 0
    %574 = vmatpush1.bf16.msra.mxu0 %v550
    %575 = vmatprep.subr.bf16.mxu0 0
    %576 = vmatpush1.bf16.msra.mxu0 0
    %577 = vmatprep.subr.bf16.mxu0 0
    %578 = vmatpush1.bf16.msra.mxu0 0
    %579 = vmatprep.subr.bf16.mxu0 0
    %580 = vmatpush1.bf16.msra.mxu0 0
    %581 = vmatprep.subr.bf16.mxu0 0
    %582 = vmatpush1.bf16.msra.mxu0 0
    %583 = vmatprep.subr.bf16.mxu0 0
    %584 = vmatpush1.bf16.msra.mxu0 0
    %585 = vmatprep.subr.bf16.mxu0 0
    %586 = vmatpush1.bf16.msra.mxu0 0
    %587 = vmatprep.subr.bf16.mxu0 0
    %588 = vmatpush1.bf16.msra.mxu0 0
    %589 = vmatprep.subr.bf16.mxu0 0
    %590 = vmatpush1.bf16.msra.mxu0 0
    %591 = vmatprep.mubr.bf16.mxu0 0
    %592 = vmatmul.mubr.bf16.gmra.mrb[0].mxu0 %v505
    %v593 = vpop.f32.mrb[0].mxu0
    %v594 = vadd.f32 %v510, %v593
    %v595 = vpop.f32.mrb[0].mxu0
    %v596 = vpop.f32.mrb[0].mxu0
    %v597 = vadd.f32 %v510, %v596
    %v598 = vpop.f32.mrb[0].mxu0
    %599 = vmatprep.mubr.bf16.mxu0 0
    %600 = vmatmul.mubr.bf16.gmra.mrb[0].mxu0 %v506
    %v601 = vpop.f32.mrb[0].mxu0
    %v602 = vadd.f32 %v510, %v601
    %v603 = vpop.f32.mrb[0].mxu0
    %v604 = vpop.f32.mrb[0].mxu0
    %v605 = vadd.f32 %v510, %v604
    %v606 = vpop.f32.mrb[0].mxu0
    %607 = vdwg.mxu0
    %vm608 = vcmp.ge.f32.partialorder %v594, 0.0
    %vm609 = vcmp.ge.f32.partialorder %v597, 0.0
    %vm610 = vcmp.ge.f32.partialorder %v602, 0.0
    %vm611 = vcmp.ge.f32.partialorder %v605, 0.0
    %v612 = vmul.f32 %v594, 0.2
    %v613 = vmul.f32 %v597, 0.2
    %v614 = vmul.f32 %v602, 0.2
    %v615 = vmul.f32 %v605, 0.2
    %v616 = vsel %vm608, %v594, %v612
    %v617 = vsel %vm609, %v597, %v613
    %v618 = vsel %vm610, %v602, %v614
    %v619 = vsel %vm611, %v605, %v615
    %v620 = vmul.f32 %v616, %v616
    %v621 = vmul.f32 %v617, %v617
    %v622 = vmul.f32 %v618, %v618
    %v623 = vmul.f32 %v619, %v619
    %624 = vmatprep.subr.mxu0 %v620
    %625 = vmatpush1.msra.mxu0 %v616
    %626 = vmatprep.subr.mxu0 %v621
    %627 = vmatpush1.msra.mxu0 %v617
    %628 = vmatprep.subr.mxu0 %v622
    %629 = vmatpush1.msra.mxu0 %v618
    %630 = vmatprep.subr.mxu0 %v623
    %631 = vmatpush1.msra.mxu0 %v619
    %632 = vmatprep.subr.mxu0 0.0
    %633 = vmatpush1.msra.mxu0 0.0
    %634 = vmatprep.subr.mxu0 0.0
    %635 = vmatpush1.msra.mxu0 0.0
    %636 = vmatprep.subr.mxu0 0.0
    %637 = vmatpush1.msra.mxu0 0.0
    %638 = vmatprep.subr.mxu0 0.0
    %639 = vmatpush1.msra.mxu0 0.0
    %640 = vmatprep.subr.mxu0 0.0
    %641 = vmatpush1.msra.mxu0 0.0
    %642 = vmatprep.subr.mxu0 0.0
    %643 = vmatpush1.msra.mxu0 0.0
    %644 = vmatprep.subr.mxu0 0.0
    %645 = vmatpush1.msra.mxu0 0.0
    %646 = vmatprep.subr.mxu0 0.0
    %647 = vmatpush1.msra.mxu0 0.0
    %648 = vmatprep.subr.mxu0 0.0
    %649 = vmatpush1.msra.mxu0 0.0
    %650 = vmatprep.subr.mxu0 0.0
    %651 = vmatpush1.msra.mxu0 0.0
    %652 = vmatprep.subr.mxu0 0.0
    %653 = vmatpush1.msra.mxu0 0.0
    %654 = vmatprep.subr.mxu0 0.0
    %655 = vmatpush1.msra.mxu0 0.0
    %656 = vmatprep.subr.mxu0 0.0
    %657 = vmatpush1.msra.mxu0 0.0
    %658 = vmatprep.subr.mxu0 0.0
    %659 = vmatpush1.msra.mxu0 0.0
    %660 = vmatprep.subr.mxu0 0.0
    %661 = vmatpush1.msra.mxu0 0.0
    %662 = vmatprep.subr.mxu0 0.0
    %663 = vmatpush1.msra.mxu0 0.0
    %664 = vmatprep.subr.mxu0 0.0
    %665 = vmatpush1.msra.mxu0 0.0
    %666 = vmatprep.subr.mxu0 0.0
    %667 = vmatpush1.msra.mxu0 0.0
    %668 = vmatprep.subr.mxu0 0.0
    %669 = vmatpush1.msra.mxu0 0.0
    %670 = vmatprep.subr.mxu0 0.0
    %671 = vmatpush1.msra.mxu0 0.0
    %672 = vmatprep.subr.mxu0 0.0
    %673 = vmatpush1.msra.mxu0 0.0
    %674 = vmatprep.subr.mxu0 0.0
    %675 = vmatpush1.msra.mxu0 0.0
    %676 = vmatprep.subr.mxu0 0.0
    %677 = vmatpush1.msra.mxu0 0.0
    %678 = vmatprep.subr.mxu0 0.0
    %679 = vmatpush1.msra.mxu0 0.0
    %680 = vmatprep.subr.mxu0 0.0
    %681 = vmatpush1.msra.mxu0 0.0
    %682 = vmatprep.subr.mxu0 0.0
    %683 = vmatpush1.msra.mxu0 0.0
    %684 = vmatprep.subr.mxu0 0.0
    %685 = vmatpush1.msra.mxu0 0.0
    %686 = vmatprep.subr.mxu0 0.0
    %687 = vmatpush1.msra.mxu0 0.0
    %688 = vmatprep.mubr.f32.mxu0 0.0
    %689 = vmatmul.mubr.f32.gmra.mrb[0].mxu0 %v378
    %v690 = vpop.f32.mrb[0].mxu0
    %v691 = vadd.f32 0.0, %v690
    %v692 = vpop.f32.mrb[0].mxu0
    %v693 = vadd.f32 0.0, %v692
    %694 = vdwg.mxu0
    %v695 = vmul.f32 %v691, %v451
    %v696 = vmul.f32 %v693, %v451
    %v697 = vmul.f32 %v695, %v695
    %v698 = vsub.f32 %v696, %v697
    %v699 = vmax.f32 %v698, 0.0
    %v700 = vadd.f32 %v699, 1e-05
    %v701 = vrsqrt.pop %v700
    %v702 = vrot.slane %v83, 5
    %v704 = vmul.f32 %v701, %v702
    %v705 = vmul.f32 %v695, %v704
    %v707 = vrot.slane %v705, 2
    %v709 = vsub.f32 %v83, %v707
    %v710 = vlaneseq
    %v711 = vshrl.u32 %v710, 7
    %v712 = vsub.s32 0, %v711
    %v713 = vrot.slane %v704, %v712
    %v714 = vmul.f32 %v616, %v713
    %v715 = vmul.f32 %v617, %v713
    %v716 = vmul.f32 %v618, %v713
    %v717 = vmul.f32 %v619, %v713
    %v718 = vlaneseq
    %v719 = vshrl.u32 %v718, 7
    %v720 = vsub.s32 6, %v719
    %v721 = vrot.slane %v709, %v720
    %v722 = vadd.f32 %v714, %v721
    %v723 = vadd.f32 %v715, %v721
    %v724 = vadd.f32 %v716, %v721
    %v725 = vadd.f32 %v717, %v721
    %v726 = vmul.f32 %v722, %v93
    %v727 = vmul.f32 %v723, %v98
    %v728 = vmul.f32 %v724, %v103
    %v729 = vmul.f32 %v725, %v108
    %v730 = vld [vmem:[#allocation7] sm:$0xf]
    %v731 = vld [vmem:[#allocation7 + $0x4] sm:$0xf]
    %v732 = vld [vmem:[#allocation7 + $0x8] sm:$0xf]
    %v733 = vld [vmem:[#allocation7 + $0xc] sm:$0xf]
    %v734 = vld [vmem:[#allocation7 + $0x10] sm:$0xf]
    %v735 = vld [vmem:[#allocation7 + $0x14] sm:$0xf]
    %v736 = vld [vmem:[#allocation7 + $0x18] sm:$0xf]
    %v737 = vld [vmem:[#allocation7 + $0x1c] sm:$0xf]
    %v738 = vld [vmem:[#allocation7 + $0x20] sm:$0xf]
    %v739 = vld [vmem:[#allocation7 + $0x24] sm:$0xf]
    %v740 = vld [vmem:[#allocation7 + $0x28] sm:$0xf]
    %v741 = vld [vmem:[#allocation7 + $0x2c] sm:$0xf]
    %v742 = vld [vmem:[#allocation7 + $0x30] sm:$0xf]
    %v743 = vld [vmem:[#allocation7 + $0x34] sm:$0xf]
    %v744 = vld [vmem:[#allocation7 + $0x38] sm:$0xf]
    %v745 = vld [vmem:[#allocation7 + $0x3c] sm:$0xf]
    %v746 = vpack.c.bf16 %v727, %v726
    %v747 = vpack.c.bf16 %v729, %v728
    %v748 = vlaneseq
    %v749 = vshrl.u32 %v748, 7
    %v750 = vsub.s32 7, %v749
    %v751 = vrot.slane %v83, %v750
    %v768 = vunpack.c.l.b16 %v730
    %v769 = vunpack.c.l.b16 %v731
    %v770 = vunpack.c.l.b16 %v732
    %v771 = vunpack.c.l.b16 %v733
    %v772 = vunpack.c.l.b16 %v734
    %v773 = vunpack.c.l.b16 %v735
    %v774 = vunpack.c.l.b16 %v736
    %v775 = vunpack.c.l.b16 %v737
    %v776 = vunpack.c.l.b16 %v738
    %v777 = vunpack.c.l.b16 %v739
    %v778 = vunpack.c.l.b16 %v740
    %v779 = vunpack.c.l.b16 %v741
    %v780 = vunpack.c.l.b16 %v742
    %v781 = vunpack.c.l.b16 %v743
    %v782 = vunpack.c.l.b16 %v744
    %v783 = vunpack.c.l.b16 %v745
    %v784 = vpack.c.b16 %v769, %v768
    %v785 = vpack.c.b16 %v771, %v770
    %v786 = vpack.c.b16 %v773, %v772
    %v787 = vpack.c.b16 %v775, %v774
    %v788 = vpack.c.b16 %v777, %v776
    %v789 = vpack.c.b16 %v779, %v778
    %v790 = vpack.c.b16 %v781, %v780
    %v791 = vpack.c.b16 %v783, %v782
    %800 = vmatprep.subr.bf16.mxu0 0
    %801 = vmatpush1.bf16.msra.mxu0 %v784
    %802 = vmatprep.subr.bf16.mxu0 0
    %803 = vmatpush1.bf16.msra.mxu0 %v785
    %804 = vmatprep.subr.bf16.mxu0 0
    %805 = vmatpush1.bf16.msra.mxu0 %v786
    %806 = vmatprep.subr.bf16.mxu0 0
    %807 = vmatpush1.bf16.msra.mxu0 %v787
    %808 = vmatprep.subr.bf16.mxu0 0
    %809 = vmatpush1.bf16.msra.mxu0 %v788
    %810 = vmatprep.subr.bf16.mxu0 0
    %811 = vmatpush1.bf16.msra.mxu0 %v789
    %812 = vmatprep.subr.bf16.mxu0 0
    %813 = vmatpush1.bf16.msra.mxu0 %v790
    %814 = vmatprep.subr.bf16.mxu0 0
    %815 = vmatpush1.bf16.msra.mxu0 %v791
    %816 = vmatprep.subr.bf16.mxu0 0
    %817 = vmatpush1.bf16.msra.mxu0 0
    %818 = vmatprep.subr.bf16.mxu0 0
    %819 = vmatpush1.bf16.msra.mxu0 0
    %820 = vmatprep.subr.bf16.mxu0 0
    %821 = vmatpush1.bf16.msra.mxu0 0
    %822 = vmatprep.subr.bf16.mxu0 0
    %823 = vmatpush1.bf16.msra.mxu0 0
    %824 = vmatprep.subr.bf16.mxu0 0
    %825 = vmatpush1.bf16.msra.mxu0 0
    %826 = vmatprep.subr.bf16.mxu0 0
    %827 = vmatpush1.bf16.msra.mxu0 0
    %828 = vmatprep.subr.bf16.mxu0 0
    %829 = vmatpush1.bf16.msra.mxu0 0
    %830 = vmatprep.subr.bf16.mxu0 0
    %831 = vmatpush1.bf16.msra.mxu0 0
    %832 = vmatprep.mubr.bf16.mxu0 0
    %833 = vmatmul.mubr.bf16.gmra.mrb[0].mxu0 %v746
    %v834 = vpop.f32.mrb[0].mxu0
    %v835 = vadd.f32 %v751, %v834
    %v836 = vpop.f32.mrb[0].mxu0
    %v837 = vpop.f32.mrb[0].mxu0
    %v838 = vadd.f32 %v751, %v837
    %v839 = vpop.f32.mrb[0].mxu0
    %840 = vmatprep.mubr.bf16.mxu0 0
    %841 = vmatmul.mubr.bf16.gmra.mrb[0].mxu0 %v747
    %v842 = vpop.f32.mrb[0].mxu0
    %v843 = vadd.f32 %v751, %v842
    %v844 = vpop.f32.mrb[0].mxu0
    %v845 = vpop.f32.mrb[0].mxu0
    %v846 = vadd.f32 %v751, %v845
    %v847 = vpop.f32.mrb[0].mxu0
    %848 = vdwg.mxu0
    %vm849 = vcmp.ge.f32.partialorder %v835, 0.0
    %vm850 = vcmp.ge.f32.partialorder %v838, 0.0
    %vm851 = vcmp.ge.f32.partialorder %v843, 0.0
    %vm852 = vcmp.ge.f32.partialorder %v846, 0.0
    %v853 = vmul.f32 %v835, 0.2
    %v854 = vmul.f32 %v838, 0.2
    %v855 = vmul.f32 %v843, 0.2
    %v856 = vmul.f32 %v846, 0.2
    %v857 = vsel %vm849, %v835, %v853
    %v858 = vsel %vm850, %v838, %v854
    %v859 = vsel %vm851, %v843, %v855
    %v860 = vsel %vm852, %v846, %v856
    %v861 = vld [vmem:[#allocation7 + $0x40] sm:$0xf]
    %v862 = vld [vmem:[#allocation7 + $0x44] sm:$0xf]
    %v863 = vld [vmem:[#allocation7 + $0x48] sm:$0xf]
    %v864 = vld [vmem:[#allocation7 + $0x4c] sm:$0xf]
    %v865 = vld [vmem:[#allocation7 + $0x50] sm:$0xf]
    %v866 = vld [vmem:[#allocation7 + $0x54] sm:$0xf]
    %v867 = vld [vmem:[#allocation7 + $0x58] sm:$0xf]
    %v868 = vld [vmem:[#allocation7 + $0x5c] sm:$0xf]
    %v869 = vld [vmem:[#allocation7 + $0x60] sm:$0xf]
    %v870 = vld [vmem:[#allocation7 + $0x64] sm:$0xf]
    %v871 = vld [vmem:[#allocation7 + $0x68] sm:$0xf]
    %v872 = vld [vmem:[#allocation7 + $0x6c] sm:$0xf]
    %v873 = vld [vmem:[#allocation7 + $0x70] sm:$0xf]
    %v874 = vld [vmem:[#allocation7 + $0x74] sm:$0xf]
    %v875 = vld [vmem:[#allocation7 + $0x78] sm:$0xf]
    %v876 = vld [vmem:[#allocation7 + $0x7c] sm:$0xf]
    %v877 = vpack.c.bf16 %v858, %v857
    %v878 = vpack.c.bf16 %v860, %v859
    %v879 = vlaneseq
    %v880 = vshrl.u32 %v879, 7
    %v881 = vsub.s32 0, %v880
    %v882 = vrot.slane %v84, %v881
    %v899 = vunpack.c.l.b16 %v861
    %v900 = vunpack.c.l.b16 %v862
    %v901 = vunpack.c.l.b16 %v863
    %v902 = vunpack.c.l.b16 %v864
    %v903 = vunpack.c.l.b16 %v865
    %v904 = vunpack.c.l.b16 %v866
    %v905 = vunpack.c.l.b16 %v867
    %v906 = vunpack.c.l.b16 %v868
    %v907 = vunpack.c.l.b16 %v869
    %v908 = vunpack.c.l.b16 %v870
    %v909 = vunpack.c.l.b16 %v871
    %v910 = vunpack.c.l.b16 %v872
    %v911 = vunpack.c.l.b16 %v873
    %v912 = vunpack.c.l.b16 %v874
    %v913 = vunpack.c.l.b16 %v875
    %v914 = vunpack.c.l.b16 %v876
    %v915 = vpack.c.b16 %v900, %v899
    %v916 = vpack.c.b16 %v902, %v901
    %v917 = vpack.c.b16 %v904, %v903
    %v918 = vpack.c.b16 %v906, %v905
    %v919 = vpack.c.b16 %v908, %v907
    %v920 = vpack.c.b16 %v910, %v909
    %v921 = vpack.c.b16 %v912, %v911
    %v922 = vpack.c.b16 %v914, %v913
    %931 = vmatprep.subr.bf16.mxu0 0
    %932 = vmatpush1.bf16.msra.mxu0 %v915
    %933 = vmatprep.subr.bf16.mxu0 0
    %934 = vmatpush1.bf16.msra.mxu0 %v916
    %935 = vmatprep.subr.bf16.mxu0 0
    %936 = vmatpush1.bf16.msra.mxu0 %v917
    %937 = vmatprep.subr.bf16.mxu0 0
    %938 = vmatpush1.bf16.msra.mxu0 %v918
    %939 = vmatprep.subr.bf16.mxu0 0
    %940 = vmatpush1.bf16.msra.mxu0 %v919
    %941 = vmatprep.subr.bf16.mxu0 0
    %942 = vmatpush1.bf16.msra.mxu0 %v920
    %943 = vmatprep.subr.bf16.mxu0 0
    %944 = vmatpush1.bf16.msra.mxu0 %v921
    %945 = vmatprep.subr.bf16.mxu0 0
    %946 = vmatpush1.bf16.msra.mxu0 %v922
    %947 = vmatprep.subr.bf16.mxu0 0
    %948 = vmatpush1.bf16.msra.mxu0 0
    %949 = vmatprep.subr.bf16.mxu0 0
    %950 = vmatpush1.bf16.msra.mxu0 0
    %951 = vmatprep.subr.bf16.mxu0 0
    %952 = vmatpush1.bf16.msra.mxu0 0
    %953 = vmatprep.subr.bf16.mxu0 0
    %954 = vmatpush1.bf16.msra.mxu0 0
    %955 = vmatprep.subr.bf16.mxu0 0
    %956 = vmatpush1.bf16.msra.mxu0 0
    %957 = vmatprep.subr.bf16.mxu0 0
    %958 = vmatpush1.bf16.msra.mxu0 0
    %959 = vmatprep.subr.bf16.mxu0 0
    %960 = vmatpush1.bf16.msra.mxu0 0
    %961 = vmatprep.subr.bf16.mxu0 0
    %962 = vmatpush1.bf16.msra.mxu0 0
    %963 = vmatprep.mubr.bf16.mxu0 0
    %964 = vmatmul.mubr.bf16.gmra.mrb[0].mxu0 %v877
    %v965 = vpop.f32.mrb[0].mxu0
    %v966 = vadd.f32 %v882, %v965
    %v967 = vpop.f32.mrb[0].mxu0
    %v968 = vpop.f32.mrb[0].mxu0
    %v969 = vadd.f32 %v882, %v968
    %v970 = vpop.f32.mrb[0].mxu0
    %971 = vmatprep.mubr.bf16.mxu0 0
    %972 = vmatmul.mubr.bf16.gmra.mrb[0].mxu0 %v878
    %v973 = vpop.f32.mrb[0].mxu0
    %v974 = vadd.f32 %v882, %v973
    %v975 = vpop.f32.mrb[0].mxu0
    %v976 = vpop.f32.mrb[0].mxu0
    %v977 = vadd.f32 %v882, %v976
    %v978 = vpop.f32.mrb[0].mxu0
    %979 = vdwg.mxu0
    %vm980 = vcmp.ge.f32.partialorder %v966, 0.0
    %vm981 = vcmp.ge.f32.partialorder %v969, 0.0
    %vm982 = vcmp.ge.f32.partialorder %v974, 0.0
    %vm983 = vcmp.ge.f32.partialorder %v977, 0.0
    %v984 = vmul.f32 %v966, 0.2
    %v985 = vmul.f32 %v969, 0.2
    %v986 = vmul.f32 %v974, 0.2
    %v987 = vmul.f32 %v977, 0.2
    %v988 = vsel %vm980, %v966, %v984
    %v989 = vsel %vm981, %v969, %v985
    %v990 = vsel %vm982, %v974, %v986
    %v991 = vsel %vm983, %v977, %v987
    %vm992 = vcmask 64512
    %v993 = vsel %vm992, %v988, 0.0
    %v994 = vsel %vm992, %v990, 0.0
    %v995 = vadd.f32 %v993, %v994
    %996 = vadd.xlane.f32.xlu0 %v995
    %v997 = vpop.xlane.xlu0 %996
    %v998 = vsel %vm992, %v989, 0.0
    %v999 = vsel %vm992, %v991, 0.0
    %v1000 = vadd.f32 %v998, %v999
    %1001 = vadd.xlane.f32.xlu0 %v1000
    %v1002 = vpop.xlane.xlu0 %1001
    %v1003 = vmul.f32 %v988, %v988
    %v1004 = vmul.f32 %v989, %v989
    %v1005 = vmul.f32 %v990, %v990
    %v1006 = vmul.f32 %v991, %v991
    %v1007 = vsel %vm992, %v1003, 0.0
    %v1008 = vsel %vm992, %v1005, 0.0
    %v1009 = vadd.f32 %v1007, %v1008
    %1010 = vadd.xlane.f32.xlu0 %v1009
    %v1011 = vpop.xlane.xlu0 %1010
    %v1012 = vsel %vm992, %v1004, 0.0
    %v1013 = vsel %vm992, %v1006, 0.0
    %v1014 = vadd.f32 %v1012, %v1013
    %1015 = vadd.xlane.f32.xlu0 %v1014
    %v1016 = vpop.xlane.xlu0 %1015
    %v1017 = vrcp.pop 16.0
    %v1018 = vmul.f32 %v997, %v1017
    %v1019 = vmul.f32 %v1002, %v1017
    %v1020 = vmul.f32 %v1011, %v1017
    %v1021 = vmul.f32 %v1016, %v1017
    %v1022 = vmul.f32 %v1018, %v1018
    %v1023 = vmul.f32 %v1019, %v1019
    %v1024 = vsub.f32 %v1020, %v1022
    %v1025 = vsub.f32 %v1021, %v1023
    %v1026 = vmax.f32 %v1024, 0.0
    %v1027 = vmax.f32 %v1025, 0.0
    %v1028 = vadd.f32 %v1026, 1e-05
    %v1029 = vadd.f32 %v1027, 1e-05
    %v1030 = vrsqrt.pop %v1028
    %v1031 = vrsqrt.pop %v1029
    %v1032 = vlaneseq
    %v1033 = vshrl.u32 %v1032, 7
    %v1034 = vsub.s32 4, %v1033
    %v1035 = vrot.slane %v84, %v1034
    %1037 = vbcast.lane.b32.xlu0 %v1035, 256
    %v1038 = vpop.permute.xlu0 %1037
    %s1040 = sor.u32 256, 8
    %1041 = vbcast.lane.b32.xlu0 %v1035, %s1040
    %v1042 = vpop.permute.xlu0 %1041
    %v1043 = vmul.f32 %v1030, %v1038
    %v1044 = vmul.f32 %v1031, %v1042
    %v1045 = vlaneseq
    %v1046 = vshrl.u32 %v1045, 7
    %v1047 = vsub.s32 5, %v1046
    %v1048 = vrot.slane %v84, %v1047
    %1050 = vbcast.lane.b32.xlu0 %v1048, 256
    %v1051 = vpop.permute.xlu0 %1050
    %s1053 = sor.u32 256, 8
    %1054 = vbcast.lane.b32.xlu0 %v1048, %s1053
    %v1055 = vpop.permute.xlu0 %1054
    %v1056 = vmul.f32 %v1018, %v1043
    %v1057 = vmul.f32 %v1019, %v1044
    %v1058 = vsub.f32 %v1051, %v1056
    %v1059 = vsub.f32 %v1055, %v1057
    %v1060 = vmul.f32 %v988, %v1043
    %v1061 = vmul.f32 %v989, %v1044
    %v1062 = vmul.f32 %v990, %v1043
    %v1063 = vmul.f32 %v991, %v1044
    %v1064 = vadd.f32 %v1060, %v1058
    %v1065 = vadd.f32 %v1061, %v1059
    %v1066 = vadd.f32 %v1062, %v1058
    %v1067 = vadd.f32 %v1063, %v1059
    %v1068 = vcombine.high %v1064, 0.0
    %v1070 = vunpack.c.l.s4 1983009808
    %v1071 = vunpack.c.0.s8 %v1070
    %v1072 = vlaneseq
    %v1073 = vshrl.u32 %v1072, 7
    %v1074 = vsub.s32 %v1071, %v1073
    %v1075 = vrot.slane %v1064, %v1074
    %v1077 = vunpack.c.l.s4 1983009808
    %v1078 = vunpack.c.0.s8 %v1077
    %v1079 = vlaneseq
    %v1080 = vshrl.u32 %v1079, 7
    %v1081 = vsub.s32 %v1078, %v1080
    %v1082 = vrot.slane %v1068, %v1081
    %v1083 = vcombine.high %v1066, 0.0
    %v1085 = vunpack.c.l.s4 1983009808
    %v1086 = vunpack.c.0.s8 %v1085
    %v1087 = vlaneseq
    %v1088 = vshrl.u32 %v1087, 7
    %v1089 = vsub.s32 %v1086, %v1088
    %v1090 = vrot.slane %v1066, %v1089
    %v1092 = vunpack.c.l.s4 1983009808
    %v1093 = vunpack.c.0.s8 %v1092
    %v1094 = vlaneseq
    %v1095 = vshrl.u32 %v1094, 7
    %v1096 = vsub.s32 %v1093, %v1095
    %v1097 = vrot.slane %v1083, %v1096
    %v1098 = vcombine.low %v1075, %v1090
    %v1099 = vcombine.high %v1075, %v1090
    %v1101 = vunpack.c.l.s4 1934713408
    %v1102 = vunpack.c.0.s8 %v1101
    %v1103 = vlaneseq
    %v1104 = vshrl.u32 %v1103, 7
    %v1105 = vsub.s32 %v1102, %v1104
    %v1106 = vrot.slane %v1098, %v1105
    %v1108 = vunpack.c.l.s4 1934713408
    %v1109 = vunpack.c.0.s8 %v1108
    %v1110 = vlaneseq
    %v1111 = vshrl.u32 %v1110, 7
    %v1112 = vsub.s32 %v1109, %v1111
    %v1113 = vrot.slane %v1099, %v1112
    %v1114 = vcombine.low %v1082, %v1097
    %v1115 = vcombine.high %v1082, %v1097
    %v1117 = vunpack.c.l.s4 1934713408
    %v1118 = vunpack.c.0.s8 %v1117
    %v1119 = vlaneseq
    %v1120 = vshrl.u32 %v1119, 7
    %v1121 = vsub.s32 %v1118, %v1120
    %v1122 = vrot.slane %v1114, %v1121
    %v1124 = vunpack.c.l.s4 1934713408
    %v1125 = vunpack.c.0.s8 %v1124
    %v1126 = vlaneseq
    %v1127 = vshrl.u32 %v1126, 7
    %v1128 = vsub.s32 %v1125, %v1127
    %v1129 = vrot.slane %v1115, %v1128
    %v1130 = vcombine.high %v1106, 0.0
    %v1131 = vcombine.high %v1113, 0.0
    %v1132 = vcombine.high %v1122, 0.0
    %v1133 = vcombine.high %v1129, 0.0
    %v1134 = vcombine.high %v1065, 0.0
    %v1136 = vunpack.c.l.s4 1983009808
    %v1137 = vunpack.c.0.s8 %v1136
    %v1138 = vlaneseq
    %v1139 = vshrl.u32 %v1138, 7
    %v1140 = vsub.s32 %v1137, %v1139
    %v1141 = vrot.slane %v1065, %v1140
    %v1143 = vunpack.c.l.s4 1983009808
    %v1144 = vunpack.c.0.s8 %v1143
    %v1145 = vlaneseq
    %v1146 = vshrl.u32 %v1145, 7
    %v1147 = vsub.s32 %v1144, %v1146
    %v1148 = vrot.slane %v1134, %v1147
    %v1149 = vcombine.high %v1067, 0.0
    %v1151 = vunpack.c.l.s4 1983009808
    %v1152 = vunpack.c.0.s8 %v1151
    %v1153 = vlaneseq
    %v1154 = vshrl.u32 %v1153, 7
    %v1155 = vsub.s32 %v1152, %v1154
    %v1156 = vrot.slane %v1067, %v1155
    %v1158 = vunpack.c.l.s4 1983009808
    %v1159 = vunpack.c.0.s8 %v1158
    %v1160 = vlaneseq
    %v1161 = vshrl.u32 %v1160, 7
    %v1162 = vsub.s32 %v1159, %v1161
    %v1163 = vrot.slane %v1149, %v1162
    %v1164 = vcombine.low %v1141, %v1156
    %v1165 = vcombine.high %v1141, %v1156
    %v1167 = vunpack.c.l.s4 1934713408
    %v1168 = vunpack.c.0.s8 %v1167
    %v1169 = vlaneseq
    %v1170 = vshrl.u32 %v1169, 7
    %v1171 = vsub.s32 %v1168, %v1170
    %v1172 = vrot.slane %v1164, %v1171
    %v1174 = vunpack.c.l.s4 1934713408
    %v1175 = vunpack.c.0.s8 %v1174
    %v1176 = vlaneseq
    %v1177 = vshrl.u32 %v1176, 7
    %v1178 = vsub.s32 %v1175, %v1177
    %v1179 = vrot.slane %v1165, %v1178
    %v1180 = vcombine.low %v1148, %v1163
    %v1181 = vcombine.high %v1148, %v1163
    %v1183 = vunpack.c.l.s4 1934713408
    %v1184 = vunpack.c.0.s8 %v1183
    %v1185 = vlaneseq
    %v1186 = vshrl.u32 %v1185, 7
    %v1187 = vsub.s32 %v1184, %v1186
    %v1188 = vrot.slane %v1180, %v1187
    %v1190 = vunpack.c.l.s4 1934713408
    %v1191 = vunpack.c.0.s8 %v1190
    %v1192 = vlaneseq
    %v1193 = vshrl.u32 %v1192, 7
    %v1194 = vsub.s32 %v1191, %v1193
    %v1195 = vrot.slane %v1181, %v1194
    %v1196 = vcombine.high %v1172, 0.0
    %v1197 = vcombine.high %v1179, 0.0
    %v1198 = vcombine.high %v1188, 0.0
    %v1199 = vcombine.high %v1195, 0.0
    %1201 = vrot.lane.b32.xlu0 %v1130, 8
    %v1202 = vpop.permute.xlu0 %1201
    %1205 = vrot.lane.b32.xlu0 %v1113, 16
    %v1206 = vpop.permute.xlu0 %1205
    %1209 = vrot.lane.b32.xlu0 %v1131, 24
    %v1210 = vpop.permute.xlu0 %1209
    %1213 = vrot.lane.b32.xlu0 %v1122, 32
    %v1214 = vpop.permute.xlu0 %1213
    %1217 = vrot.lane.b32.xlu0 %v1132, 40
    %v1218 = vpop.permute.xlu0 %1217
    %1221 = vrot.lane.b32.xlu0 %v1129, 48
    %v1222 = vpop.permute.xlu0 %1221
    %1225 = vrot.lane.b32.xlu0 %v1133, 56
    %v1226 = vpop.permute.xlu0 %1225
    %1229 = vrot.lane.b32.xlu0 %v1172, 64
    %v1230 = vpop.permute.xlu0 %1229
    %1233 = vrot.lane.b32.xlu0 %v1196, 72
    %v1234 = vpop.permute.xlu0 %1233
    %1237 = vrot.lane.b32.xlu0 %v1179, 80
    %v1238 = vpop.permute.xlu0 %1237
    %1241 = vrot.lane.b32.xlu0 %v1197, 88
    %v1242 = vpop.permute.xlu0 %1241
    %1245 = vrot.lane.b32.xlu0 %v1188, 96
    %v1246 = vpop.permute.xlu0 %1245
    %1249 = vrot.lane.b32.xlu0 %v1198, 104
    %v1250 = vpop.permute.xlu0 %1249
    %1253 = vrot.lane.b32.xlu0 %v1195, 112
    %v1254 = vpop.permute.xlu0 %1253
    %1257 = vrot.lane.b32.xlu0 %v1199, 120
    %v1258 = vpop.permute.xlu0 %1257
    %v1260 = vsel %vm992, %v1106, %v1202
    %vm1261 = vcmask 130048
    %v1262 = vsel %vm1261, %v1260, %v1206
    %vm1263 = vcmask 195584
    %v1264 = vsel %vm1263, %v1262, %v1210
    %v1265 = vsel %vm376, %v1264, %v1214
    %vm1266 = vcmask 326656
    %v1267 = vsel %vm1266, %v1265, %v1218
    %vm1268 = vcmask 392192
    %v1269 = vsel %vm1268, %v1267, %v1222
    %vm1270 = vcmask 457728
    %v1271 = vsel %vm1270, %v1269, %v1226
    %vm1272 = vcmask 523264
    %v1273 = vsel %vm1272, %v1271, %v1230
    %vm1274 = vcmask 588800
    %v1275 = vsel %vm1274, %v1273, %v1234
    %vm1276 = vcmask 654336
    %v1277 = vsel %vm1276, %v1275, %v1238
    %vm1278 = vcmask 719872
    %v1279 = vsel %vm1278, %v1277, %v1242
    %vm1280 = vcmask 785408
    %v1281 = vsel %vm1280, %v1279, %v1246
    %vm1282 = vcmask 850944
    %v1283 = vsel %vm1282, %v1281, %v1250
    %vm1284 = vcmask 916480
    %v1285 = vsel %vm1284, %v1283, %v1254
    %vm1286 = vcmask 982016
    %v1287 = vsel %vm1286, %v1285, %v1258
    %v1288 = vld [vmem:[#allocation8] sm:$0xff]
    %v1289 = vld [vmem:[#allocation8 + $0x8] sm:$0xff]
    %v1290 = vld [vmem:[#allocation8 + $0x10] sm:$0xff]
    %v1291 = vld [vmem:[#allocation8 + $0x18] sm:$0xff]
    %v1292 = vld [vmem:[#allocation8 + $0x20] sm:$0xff]
    %v1293 = vld [vmem:[#allocation8 + $0x28] sm:$0xff]
    %v1294 = vld [vmem:[#allocation8 + $0x30] sm:$0xff]
    %v1295 = vld [vmem:[#allocation8 + $0x38] sm:$0xff]
    %v1296 = vld [vmem:[#allocation8 + $0x40] sm:$0xff]
    %v1297 = vld [vmem:[#allocation8 + $0x48] sm:$0xff]
    %v1298 = vld [vmem:[#allocation8 + $0x50] sm:$0xff]
    %v1299 = vld [vmem:[#allocation8 + $0x58] sm:$0xff]
    %v1300 = vld [vmem:[#allocation8 + $0x60] sm:$0xff]
    %v1301 = vld [vmem:[#allocation8 + $0x68] sm:$0xff]
    %v1302 = vld [vmem:[#allocation8 + $0x70] sm:$0xff]
    %v1303 = vld [vmem:[#allocation8 + $0x78] sm:$0xff]
    %v1304 = vpack.c.bf16 %v1287, %v1287
    %v1305 = vlaneseq
    %v1306 = vshrl.u32 %v1305, 7
    %v1307 = vsub.s32 1, %v1306
    %v1308 = vrot.slane %v84, %v1307
    %v1309 = vlaneseq
    %v1310 = vshrl.u32 %v1309, 7
    %v1311 = vsub.s32 1, %v1310
    %v1312 = vrot.slane %v85, %v1311
    %v1329 = vunpack.c.l.b16 %v1288
    %v1330 = vunpack.c.h.b16 %v1288
    %v1331 = vunpack.c.l.b16 %v1289
    %v1332 = vunpack.c.h.b16 %v1289
    %v1333 = vunpack.c.l.b16 %v1290
    %v1334 = vunpack.c.h.b16 %v1290
    %v1335 = vunpack.c.l.b16 %v1291
    %v1336 = vunpack.c.h.b16 %v1291
    %v1337 = vunpack.c.l.b16 %v1292
    %v1338 = vunpack.c.h.b16 %v1292
    %v1339 = vunpack.c.l.b16 %v1293
    %v1340 = vunpack.c.h.b16 %v1293
    %v1341 = vunpack.c.l.b16 %v1294
    %v1342 = vunpack.c.h.b16 %v1294
    %v1343 = vunpack.c.l.b16 %v1295
    %v1344 = vunpack.c.h.b16 %v1295
    %v1345 = vunpack.c.l.b16 %v1296
    %v1346 = vunpack.c.h.b16 %v1296
    %v1347 = vunpack.c.l.b16 %v1297
    %v1348 = vunpack.c.h.b16 %v1297
    %v1349 = vunpack.c.l.b16 %v1298
    %v1350 = vunpack.c.h.b16 %v1298
    %v1351 = vunpack.c.l.b16 %v1299
    %v1352 = vunpack.c.h.b16 %v1299
    %v1353 = vunpack.c.l.b16 %v1300
    %v1354 = vunpack.c.h.b16 %v1300
    %v1355 = vunpack.c.l.b16 %v1301
    %v1356 = vunpack.c.h.b16 %v1301
    %v1357 = vunpack.c.l.b16 %v1302
    %v1358 = vunpack.c.h.b16 %v1302
    %v1359 = vunpack.c.l.b16 %v1303
    %v1360 = vunpack.c.h.b16 %v1303
    %v1361 = vpack.c.b16 %v1331, %v1329
    %v1362 = vpack.c.b16 %v1332, %v1330
    %v1363 = vpack.c.b16 %v1335, %v1333
    %v1364 = vpack.c.b16 %v1336, %v1334
    %v1365 = vpack.c.b16 %v1339, %v1337
    %v1366 = vpack.c.b16 %v1340, %v1338
    %v1367 = vpack.c.b16 %v1343, %v1341
    %v1368 = vpack.c.b16 %v1344, %v1342
    %v1369 = vpack.c.b16 %v1347, %v1345
    %v1370 = vpack.c.b16 %v1348, %v1346
    %v1371 = vpack.c.b16 %v1351, %v1349
    %v1372 = vpack.c.b16 %v1352, %v1350
    %v1373 = vpack.c.b16 %v1355, %v1353
    %v1374 = vpack.c.b16 %v1356, %v1354
    %v1375 = vpack.c.b16 %v1359, %v1357
    %v1376 = vpack.c.b16 %v1360, %v1358
    %1393 = vmatprep.subr.bf16.mxu0 %v1362
    %1394 = vmatpush1.bf16.msra.mxu0 %v1361
    %1395 = vmatprep.subr.bf16.mxu0 %v1364
    %1396 = vmatpush1.bf16.msra.mxu0 %v1363
    %1397 = vmatprep.subr.bf16.mxu0 %v1366
    %1398 = vmatpush1.bf16.msra.mxu0 %v1365
    %1399 = vmatprep.subr.bf16.mxu0 %v1368
    %1400 = vmatpush1.bf16.msra.mxu0 %v1367
    %1401 = vmatprep.subr.bf16.mxu0 %v1370
    %1402 = vmatpush1.bf16.msra.mxu0 %v1369
    %1403 = vmatprep.subr.bf16.mxu0 %v1372
    %1404 = vmatpush1.bf16.msra.mxu0 %v1371
    %1405 = vmatprep.subr.bf16.mxu0 %v1374
    %1406 = vmatpush1.bf16.msra.mxu0 %v1373
    %1407 = vmatprep.subr.bf16.mxu0 %v1376
    %1408 = vmatpush1.bf16.msra.mxu0 %v1375
    %1409 = vmatprep.subr.bf16.mxu0 0
    %1410 = vmatpush1.bf16.msra.mxu0 0
    %1411 = vmatprep.subr.bf16.mxu0 0
    %1412 = vmatpush1.bf16.msra.mxu0 0
    %1413 = vmatprep.subr.bf16.mxu0 0
    %1414 = vmatpush1.bf16.msra.mxu0 0
    %1415 = vmatprep.subr.bf16.mxu0 0
    %1416 = vmatpush1.bf16.msra.mxu0 0
    %1417 = vmatprep.subr.bf16.mxu0 0
    %1418 = vmatpush1.bf16.msra.mxu0 0
    %1419 = vmatprep.subr.bf16.mxu0 0
    %1420 = vmatpush1.bf16.msra.mxu0 0
    %1421 = vmatprep.subr.bf16.mxu0 0
    %1422 = vmatpush1.bf16.msra.mxu0 0
    %1423 = vmatprep.subr.bf16.mxu0 0
    %1424 = vmatpush1.bf16.msra.mxu0 0
    %1425 = vmatprep.mubr.bf16.mxu0 0
    %1426 = vmatmul.mubr.bf16.gmra.mrb[0].mxu0 %v1304
    %v1427 = vpop.f32.mrb[0].mxu0
    %v1428 = vadd.f32 %v1308, %v1427
    %v1429 = vpop.f32.mrb[0].mxu0
    %v1430 = vadd.f32 %v1312, %v1429
    %v1431 = vpop.f32.mrb[0].mxu0
    %v1432 = vpop.f32.mrb[0].mxu0
    %1433 = vdwg.mxu0
    %vm1434 = vcmp.ge.f32.partialorder %v1428, 0.0
    %vm1435 = vcmp.ge.f32.partialorder %v1430, 0.0
    %v1436 = vmul.f32 %v1428, 0.2
    %v1437 = vmul.f32 %v1430, 0.2
    %v1438 = vsel %vm1434, %v1428, %v1436
    %v1439 = vsel %vm1435, %v1430, %v1437
    %v1440 = vld [vmem:[#allocation7 + $0x80] sm:$0xf]
    %v1441 = vld [vmem:[#allocation7 + $0x84] sm:$0xf]
    %v1442 = vld [vmem:[#allocation7 + $0x88] sm:$0xf]
    %v1443 = vld [vmem:[#allocation7 + $0x8c] sm:$0xf]
    %v1444 = vld [vmem:[#allocation7 + $0x90] sm:$0xf]
    %v1445 = vld [vmem:[#allocation7 + $0x94] sm:$0xf]
    %v1446 = vld [vmem:[#allocation7 + $0x98] sm:$0xf]
    %v1447 = vld [vmem:[#allocation7 + $0x9c] sm:$0xf]
    %v1448 = vld [vmem:[#allocation7 + $0xa0] sm:$0xf]
    %v1449 = vld [vmem:[#allocation7 + $0xa4] sm:$0xf]
    %v1450 = vld [vmem:[#allocation7 + $0xa8] sm:$0xf]
    %v1451 = vld [vmem:[#allocation7 + $0xac] sm:$0xf]
    %v1452 = vld [vmem:[#allocation7 + $0xb0] sm:$0xf]
    %v1453 = vld [vmem:[#allocation7 + $0xb4] sm:$0xf]
    %v1454 = vld [vmem:[#allocation7 + $0xb8] sm:$0xf]
    %v1455 = vld [vmem:[#allocation7 + $0xbc] sm:$0xf]
    %v1456 = vld [vmem:[#allocation7 + $0xc0] sm:$0xf]
    %v1457 = vld [vmem:[#allocation7 + $0xc4] sm:$0xf]
    %v1458 = vld [vmem:[#allocation7 + $0xc8] sm:$0xf]
    %v1459 = vld [vmem:[#allocation7 + $0xcc] sm:$0xf]
    %v1460 = vld [vmem:[#allocation7 + $0xd0] sm:$0xf]
    %v1461 = vld [vmem:[#allocation7 + $0xd4] sm:$0xf]
    %v1462 = vld [vmem:[#allocation7 + $0xd8] sm:$0xf]
    %v1463 = vld [vmem:[#allocation7 + $0xdc] sm:$0xf]
    %v1464 = vld [vmem:[#allocation7 + $0xe0] sm:$0xf]
    %v1465 = vld [vmem:[#allocation7 + $0xe4] sm:$0xf]
    %v1466 = vld [vmem:[#allocation7 + $0xe8] sm:$0xf]
    %v1467 = vld [vmem:[#allocation7 + $0xec] sm:$0xf]
    %v1468 = vld [vmem:[#allocation7 + $0xf0] sm:$0xf]
    %v1469 = vld [vmem:[#allocation7 + $0xf4] sm:$0xf]
    %v1470 = vld [vmem:[#allocation7 + $0xf8] sm:$0xf]
    %v1471 = vld [vmem:[#allocation7 + $0xfc] sm:$0xf]
    %v1472 = vpack.c.bf16 %v1438, %v1438
    %v1473 = vpack.c.bf16 %v1439, %v1439
    %v1474 = vlaneseq
    %v1475 = vshrl.u32 %v1474, 7
    %v1476 = vsub.s32 2, %v1475
    %v1477 = vrot.slane %v84, %v1476
    %v1510 = vunpack.c.l.b16 %v1440
    %v1511 = vunpack.c.l.b16 %v1441
    %v1512 = vunpack.c.l.b16 %v1442
    %v1513 = vunpack.c.l.b16 %v1443
    %v1514 = vunpack.c.l.b16 %v1444
    %v1515 = vunpack.c.l.b16 %v1445
    %v1516 = vunpack.c.l.b16 %v1446
    %v1517 = vunpack.c.l.b16 %v1447
    %v1518 = vunpack.c.l.b16 %v1448
    %v1519 = vunpack.c.l.b16 %v1449
    %v1520 = vunpack.c.l.b16 %v1450
    %v1521 = vunpack.c.l.b16 %v1451
    %v1522 = vunpack.c.l.b16 %v1452
    %v1523 = vunpack.c.l.b16 %v1453
    %v1524 = vunpack.c.l.b16 %v1454
    %v1525 = vunpack.c.l.b16 %v1455
    %v1526 = vunpack.c.l.b16 %v1456
    %v1527 = vunpack.c.l.b16 %v1457
    %v1528 = vunpack.c.l.b16 %v1458
    %v1529 = vunpack.c.l.b16 %v1459
    %v1530 = vunpack.c.l.b16 %v1460
    %v1531 = vunpack.c.l.b16 %v1461
    %v1532 = vunpack.c.l.b16 %v1462
    %v1533 = vunpack.c.l.b16 %v1463
    %v1534 = vunpack.c.l.b16 %v1464
    %v1535 = vunpack.c.l.b16 %v1465
    %v1536 = vunpack.c.l.b16 %v1466
    %v1537 = vunpack.c.l.b16 %v1467
    %v1538 = vunpack.c.l.b16 %v1468
    %v1539 = vunpack.c.l.b16 %v1469
    %v1540 = vunpack.c.l.b16 %v1470
    %v1541 = vunpack.c.l.b16 %v1471
    %v1542 = vpack.c.b16 %v1511, %v1510
    %v1543 = vpack.c.b16 %v1513, %v1512
    %v1544 = vpack.c.b16 %v1515, %v1514
    %v1545 = vpack.c.b16 %v1517, %v1516
    %v1546 = vpack.c.b16 %v1519, %v1518
    %v1547 = vpack.c.b16 %v1521, %v1520
    %v1548 = vpack.c.b16 %v1523, %v1522
    %v1549 = vpack.c.b16 %v1525, %v1524
    %v1550 = vpack.c.b16 %v1527, %v1526
    %v1551 = vpack.c.b16 %v1529, %v1528
    %v1552 = vpack.c.b16 %v1531, %v1530
    %v1553 = vpack.c.b16 %v1533, %v1532
    %v1554 = vpack.c.b16 %v1535, %v1534
    %v1555 = vpack.c.b16 %v1537, %v1536
    %v1556 = vpack.c.b16 %v1539, %v1538
    %v1557 = vpack.c.b16 %v1541, %v1540
    %1574 = vmatprep.subr.bf16.mxu0 0
    %1575 = vmatpush1.bf16.msra.mxu0 %v1542
    %1576 = vmatprep.subr.bf16.mxu0 0
    %1577 = vmatpush1.bf16.msra.mxu0 %v1543
    %1578 = vmatprep.subr.bf16.mxu0 0
    %1579 = vmatpush1.bf16.msra.mxu0 %v1544
    %1580 = vmatprep.subr.bf16.mxu0 0
    %1581 = vmatpush1.bf16.msra.mxu0 %v1545
    %1582 = vmatprep.subr.bf16.mxu0 0
    %1583 = vmatpush1.bf16.msra.mxu0 %v1546
    %1584 = vmatprep.subr.bf16.mxu0 0
    %1585 = vmatpush1.bf16.msra.mxu0 %v1547
    %1586 = vmatprep.subr.bf16.mxu0 0
    %1587 = vmatpush1.bf16.msra.mxu0 %v1548
    %1588 = vmatprep.subr.bf16.mxu0 0
    %1589 = vmatpush1.bf16.msra.mxu0 %v1549
    %1590 = vmatprep.subr.bf16.mxu0 0
    %1591 = vmatpush1.bf16.msra.mxu0 %v1550
    %1592 = vmatprep.subr.bf16.mxu0 0
    %1593 = vmatpush1.bf16.msra.mxu0 %v1551
    %1594 = vmatprep.subr.bf16.mxu0 0
    %1595 = vmatpush1.bf16.msra.mxu0 %v1552
    %1596 = vmatprep.subr.bf16.mxu0 0
    %1597 = vmatpush1.bf16.msra.mxu0 %v1553
    %1598 = vmatprep.subr.bf16.mxu0 0
    %1599 = vmatpush1.bf16.msra.mxu0 %v1554
    %1600 = vmatprep.subr.bf16.mxu0 0
    %1601 = vmatpush1.bf16.msra.mxu0 %v1555
    %1602 = vmatprep.subr.bf16.mxu0 0
    %1603 = vmatpush1.bf16.msra.mxu0 %v1556
    %1604 = vmatprep.subr.bf16.mxu0 0
    %1605 = vmatpush1.bf16.msra.mxu0 %v1557
    %1606 = vmatprep.mubr.bf16.mxu0 %v1473
    %1607 = vmatmul.mubr.bf16.gmra.mrb[0].mxu0 %v1472
    %v1608 = vpop.f32.mrb[0].mxu0
    %v1609 = vadd.f32 %v1477, %v1608
    %v1610 = vpop.f32.mrb[0].mxu0
    %v1611 = vpop.f32.mrb[0].mxu0
    %v1612 = vpop.f32.mrb[0].mxu0
    %1613 = vdwg.mxu0
    %vm1614 = vcmp.ge.f32.partialorder %v1609, 0.0
    %v1615 = vmul.f32 %v1609, 0.2
    %v1616 = vsel %vm1614, %v1609, %v1615
    %v1617 = vld [vmem:[#allocation7 + $0x100] sm:$0xf]
    %v1618 = vld [vmem:[#allocation7 + $0x104] sm:$0xf]
    %v1619 = vld [vmem:[#allocation7 + $0x108] sm:$0xf]
    %v1620 = vld [vmem:[#allocation7 + $0x10c] sm:$0xf]
    %v1621 = vld [vmem:[#allocation7 + $0x110] sm:$0xf]
    %v1622 = vld [vmem:[#allocation7 + $0x114] sm:$0xf]
    %v1623 = vld [vmem:[#allocation7 + $0x118] sm:$0xf]
    %v1624 = vld [vmem:[#allocation7 + $0x11c] sm:$0xf]
    %v1625 = vld [vmem:[#allocation7 + $0x120] sm:$0xf]
    %v1626 = vld [vmem:[#allocation7 + $0x124] sm:$0xf]
    %v1627 = vld [vmem:[#allocation7 + $0x128] sm:$0xf]
    %v1628 = vld [vmem:[#allocation7 + $0x12c] sm:$0xf]
    %v1629 = vld [vmem:[#allocation7 + $0x130] sm:$0xf]
    %v1630 = vld [vmem:[#allocation7 + $0x134] sm:$0xf]
    %v1631 = vld [vmem:[#allocation7 + $0x138] sm:$0xf]
    %v1632 = vld [vmem:[#allocation7 + $0x13c] sm:$0xf]
    %v1633 = vpack.c.bf16 %v1616, %v1616
    %v1634 = vlaneseq
    %v1635 = vshrl.u32 %v1634, 7
    %v1636 = vsub.s32 3, %v1635
    %v1637 = vrot.slane %v84, %v1636
    %v1654 = vunpack.c.l.b16 %v1617
    %v1655 = vunpack.c.l.b16 %v1618
    %v1656 = vunpack.c.l.b16 %v1619
    %v1657 = vunpack.c.l.b16 %v1620
    %v1658 = vunpack.c.l.b16 %v1621
    %v1659 = vunpack.c.l.b16 %v1622
    %v1660 = vunpack.c.l.b16 %v1623
    %v1661 = vunpack.c.l.b16 %v1624
    %v1662 = vunpack.c.l.b16 %v1625
    %v1663 = vunpack.c.l.b16 %v1626
    %v1664 = vunpack.c.l.b16 %v1627
    %v1665 = vunpack.c.l.b16 %v1628
    %v1666 = vunpack.c.l.b16 %v1629
    %v1667 = vunpack.c.l.b16 %v1630
    %v1668 = vunpack.c.l.b16 %v1631
    %v1669 = vunpack.c.l.b16 %v1632
    %v1670 = vpack.c.b16 %v1655, %v1654
    %v1671 = vpack.c.b16 %v1657, %v1656
    %v1672 = vpack.c.b16 %v1659, %v1658
    %v1673 = vpack.c.b16 %v1661, %v1660
    %v1674 = vpack.c.b16 %v1663, %v1662
    %v1675 = vpack.c.b16 %v1665, %v1664
    %v1676 = vpack.c.b16 %v1667, %v1666
    %v1677 = vpack.c.b16 %v1669, %v1668
    %1686 = vmatprep.subr.bf16.mxu0 0
    %1687 = vmatpush1.bf16.msra.mxu0 %v1670
    %1688 = vmatprep.subr.bf16.mxu0 0
    %1689 = vmatpush1.bf16.msra.mxu0 %v1671
    %1690 = vmatprep.subr.bf16.mxu0 0
    %1691 = vmatpush1.bf16.msra.mxu0 %v1672
    %1692 = vmatprep.subr.bf16.mxu0 0
    %1693 = vmatpush1.bf16.msra.mxu0 %v1673
    %1694 = vmatprep.subr.bf16.mxu0 0
    %1695 = vmatpush1.bf16.msra.mxu0 %v1674
    %1696 = vmatprep.subr.bf16.mxu0 0
    %1697 = vmatpush1.bf16.msra.mxu0 %v1675
    %1698 = vmatprep.subr.bf16.mxu0 0
    %1699 = vmatpush1.bf16.msra.mxu0 %v1676
    %1700 = vmatprep.subr.bf16.mxu0 0
    %1701 = vmatpush1.bf16.msra.mxu0 %v1677
    %1702 = vmatprep.subr.bf16.mxu0 0
    %1703 = vmatpush1.bf16.msra.mxu0 0
    %1704 = vmatprep.subr.bf16.mxu0 0
    %1705 = vmatpush1.bf16.msra.mxu0 0
    %1706 = vmatprep.subr.bf16.mxu0 0
    %1707 = vmatpush1.bf16.msra.mxu0 0
    %1708 = vmatprep.subr.bf16.mxu0 0
    %1709 = vmatpush1.bf16.msra.mxu0 0
    %1710 = vmatprep.subr.bf16.mxu0 0
    %1711 = vmatpush1.bf16.msra.mxu0 0
    %1712 = vmatprep.subr.bf16.mxu0 0
    %1713 = vmatpush1.bf16.msra.mxu0 0
    %1714 = vmatprep.subr.bf16.mxu0 0
    %1715 = vmatpush1.bf16.msra.mxu0 0
    %1716 = vmatprep.subr.bf16.mxu0 0
    %1717 = vmatpush1.bf16.msra.mxu0 0
    %1718 = vmatprep.mubr.bf16.mxu0 0
    %1719 = vmatmul.mubr.bf16.gmra.mrb[0].mxu0 %v1633
    %v1720 = vpop.f32.mrb[0].mxu0
    %v1721 = vadd.f32 %v1637, %v1720
    %v1722 = vpop.f32.mrb[0].mxu0
    %v1723 = vpop.f32.mrb[0].mxu0
    %v1724 = vpop.f32.mrb[0].mxu0
    %1725 = vdwg.mxu0
    %1726 = vst [vmem:[#allocation10] sm:$0x3] %v1721
    // Predicated region
    $region46: #{tpu_custom_call.1} parent=1 // pred_check
      _
    $region47: #{tpu_custom_call.1} parent=1 // pred_check_branch
      %1728 = sbr.rel (0) target = $region49
    $region48: #{tpu_custom_call.1} parent=1 // pred_region
      %s1730 = ssub.s32 32, 32
      %1731 = vsyncadd [#allocation4], %s1730
      %s1733 = sshll.u32 [#allocation10], 4
      %s1734 = int_to_ptr.vmem [resolvable:$true] %s1733
      %1736 = dma.vmem_to_hbm [thread:$0]  %s1734, 32, %s7, [#allocation4]
    $region49: #{tpu_custom_call.1} parent=1 // pred_fallthru
      _
    // Predicated region
    $region50: #{tpu_custom_call.1} parent=1 // pred_check
      _
    $region51: #{tpu_custom_call.1} parent=1 // pred_check_branch
      %1738 = sbr.rel (0) target = $region53
    $region52: #{tpu_custom_call.1} parent=1 // pred_region
      %1739 = dma.done [#allocation4], 32
    $region53: #{tpu_custom_call.1} parent=1 // pred_fallthru
      _
    %1740 = vsyncpa [#allocation3], 1
    %1741 = vsyncpa [#allocation6], 1
    %1742 = vsyncpa [#allocation9], 1
    %1743 = vsyncpa [#allocation4], 1

</llo_original>
